<compile_context>
chip_gen: v5e
topology: v5e:2x2
jax: 0.10.0
libtpu: 0.0.40
codegen_flags: <defaults>
</compile_context>

<pallas_src>
import jax
import jax.numpy as jnp
from jax import lax
from jax.experimental import pallas as pl
from jax.experimental.pallas import tpu as pltpu


def _round_up(x, m):
    return ((x + m - 1) // m) * m


# ----------------------------------------------------------------------------
# Pallas kernel: fused patchify + projection matmul + bias + ReLU
# ----------------------------------------------------------------------------
def _patch_proj_kernel(x_ref, w_ref, b_ref, o_ref, acc_ref):
    """Grid = (row_tiles, s).  x_ref is the patch-row-r activation slab for a
    tile of t rows of (B*h): shape (t, wo, s*C).  w_ref holds the full weight
    (s, s*C, N) resident in VMEM; b_ref is (1, N).  acc_ref is an f32 scratch
    (t*wo, N) resident across the r axis; o_ref (t*wo, N) is written (bias +
    ReLU + cast) only on the last r step."""
    r = pl.program_id(1)

    @pl.when(r == 0)
    def _init():
        acc_ref[...] = jnp.zeros_like(acc_ref)

    t, wo, s_c = x_ref.shape
    w = w_ref[r]                                   # (s*C, N) slab of resident weight

    if wo % 8 == 0:
        # tile-aligned leading-dim collapse (free view): one big MXU call
        x = x_ref[...].reshape(t * wo, s_c)
        acc_ref[...] += jnp.dot(x, w, preferred_element_type=jnp.float32)
    else:
        # sublane-unaligned wo: per-output-row dots avoid a vector relayout
        def one_row(it):
            acc_ref[pl.ds(it * wo, wo), :] += jnp.dot(
                x_ref[it], w, preferred_element_type=jnp.float32)

        if t <= 32:
            for it in range(t):                    # static unroll (t kept small)
                one_row(it)
        else:
            def body(it, carry):
                one_row(it)
                return carry
            lax.fori_loop(0, t, body, 0)

    @pl.when(r == pl.num_programs(1) - 1)
    def _finalize():
        o_ref[...] = jnp.maximum(acc_ref[...] + b_ref[...], 0.0).astype(o_ref.dtype)


def _choose_row_tile(m_row, wo, s_c, n_out, *, target_m=1024, min_tiles=4,
                     budget_bytes=12 * 2**20):
    """Rows of (B*h) per grid step.

    Aims for ~target_m matmul rows per step (amortize ~0.35us/step), keeps the
    f32 accumulator + double-buffered in/out tiles within a VMEM budget safe on
    v5e (16 MiB scoped default) and v7x (64 MiB physical), keeps >= min_tiles
    grid steps so both v7x TensorCores get work, and keeps the output M tile a
    multiple of 8 so no padding/ragged handling is needed."""
    lane_n = max(n_out, 128)
    lane_k = max(s_c, 128)
    per_row = wo * (lane_n * (4 + 2 * 2) + lane_k * 2 * 2)   # acc + out(x2) + in(x2)
    cap = max(1, min(target_m // max(wo, 1), budget_bytes // max(per_row, 1)))
    if m_row >= min_tiles:
        cap = min(cap, m_row // min_tiles)
    cap = max(1, min(cap, m_row))
    for t in range(cap, 0, -1):
        if m_row % t == 0 and (t * wo) % 8 == 0:
            return t
    return m_row   # single full-extent tile: always layout-legal


def patchify_project(x_nhwc_bf16, w_skn, b_1n, *, stride,
                     out_dtype=jnp.bfloat16, target_m=1024):
    """Non-overlapping stride x stride conv + bias + ReLU, fused in one kernel.

    x: (B, H, W, C) bf16, w: (s, s*C, N) bf16, b: (1, N) f32.
    Returns (B, H//s, W//s, N) in `out_dtype` (NHWC)."""
    B, H, W, C = x_nhwc_bf16.shape
    s = stride
    assert H % s == 0 and W % s == 0
    h, wo = H // s, W // s
    s_c = s * C
    n_out = w_skn.shape[-1]
    m_row = B * h

    # Pure view of contiguous NHWC: (B, H, W, C) -> (B*h, s, wo, s*C).
    x_view = x_nhwc_bf16.reshape(m_row, s, wo, s_c)

    t = _choose_row_tile(m_row, wo, s_c, n_out, target_m=target_m)
    n_tiles = m_row // t
    tm = t * wo
    m_total = m_row * wo

    lane_n = max(n_out, 128)
    lane_k = max(s_c, 128)
    vmem_bytes = (
        2 * t * max(wo, 8) * lane_k * 2     # double-buffered bf16 activation tiles
        + 2 * tm * lane_n * 2               # double-buffered output tiles
        + tm * lane_n * 4                   # f32 accumulator scratch
        + 2 * s * lane_k * lane_n * 2       # resident weight (conservative 2x)
        + 2 * 8 * lane_n * 4                # resident bias
    )
    vmem_limit = int(min(max(2 * vmem_bytes, 16 * 2**20), 64 * 2**20))

    # TODO(synk): single-buffer the resident weight/bias (pipeline_mode) to
    # halve their VMEM footprint on v7x once that path is needed.
    out = pl.pallas_call(
        _patch_proj_kernel,
        out_shape=jax.ShapeDtypeStruct((m_total, n_out), out_dtype),
        grid=(n_tiles, s),
        in_specs=[
            # patch-row-r slab of a tile of t (B*h) rows; r dim squeezed
            pl.BlockSpec((t, None, wo, s_c), lambda i, r: (i, r, 0, 0)),
            pl.BlockSpec((s, s_c, n_out), lambda i, r: (0, 0, 0)),   # resident weight
            pl.BlockSpec((1, n_out), lambda i, r: (0, 0)),           # resident bias
        ],
        out_specs=pl.BlockSpec((tm, n_out), lambda i, r: (i, 0)),
        scratch_shapes=[pltpu.VMEM((tm, n_out), jnp.float32)],
        compiler_params=pltpu.CompilerParams(
            dimension_semantics=("parallel", "arbitrary"),
            vmem_limit_bytes=vmem_limit,
        ),
    )(x_view, w_skn, b_1n)
    return out.reshape(B, h, wo, n_out)


# ----------------------------------------------------------------------------
# Mask downsampling: exact F.interpolate(m[None].float(), size, 'nearest')[0]
# ----------------------------------------------------------------------------
def nearest_mask(mask_bhw, h, w):
    B, H, W = mask_bhw.shape
    if H % h == 0 and W % w == 0:
        return mask_bhw[:, :: H // h, :: W // w]        # pure strided slice
    rows = (jnp.arange(h) * H) // h                     # legacy 'nearest' floor rule
    cols = (jnp.arange(w) * W) // w
    return mask_bhw[:, rows[:, None], cols[None, :]]    # one fused gather


# ----------------------------------------------------------------------------
# BackboneBase equivalent
# ----------------------------------------------------------------------------
class PallasBackboneBase:
    """Features are returned channels-last (NHWC) bf16 together with the
    nearest-downsampled bool padding mask (NestedTensor-like tuples)."""

    def __init__(self, strides, num_channels, in_channels, key,
                 out_dtype=jnp.bfloat16):
        self.strides = list(strides)
        self.num_channels = list(num_channels)
        self.out_dtype = out_dtype
        self.params = []
        for i, (s, c) in enumerate(zip(self.strides, self.num_channels)):
            kk = jax.random.fold_in(key, i)
            k_w, k_b = jax.random.split(kk)
            fan_in = s * s * in_channels
            # Lane padding only when c >= 128 and ragged; for small c the exact
            # width (masked stores) is cheaper than 4x padded HBM traffic.
            c_pad = c if (c < 128 or c % 128 == 0) else _round_up(c, 128)
            w = jax.random.normal(k_w, (fan_in, c), jnp.float32) / jnp.sqrt(fan_in)
            b = jax.random.normal(k_b, (1, c), jnp.float32) * 0.01
            # TODO(synk): when importing real PyTorch conv weights (O, I, kh, kw),
            # permute to (kh, kw, I, O) before this reshape so the K ordering
            # (patch_row, patch_col, in_channel) matches the kernel's patchify.
            w_skn = jnp.zeros((s, s * in_channels, c_pad), jnp.bfloat16)
            w_skn = w_skn.at[:, :, :c].set(
                w.reshape(s, s * in_channels, c).astype(jnp.bfloat16))
            b_pad = jnp.zeros((1, c_pad), jnp.float32).at[:, :c].set(b)
            self.params.append((w_skn, b_pad))

    def __call__(self, tensors, mask, *, channels_last=False):
        """tensors: (B, C, H, W) f32 (or (B, H, W, C) if channels_last),
        mask: (B, H, W) bool.  Returns dict[name] -> (NHWC features, mask)."""
        assert mask is not None
        if channels_last:
            x_nhwc = tensors.astype(jnp.bfloat16)
        else:
            # TODO(synk): keep activations NHWC bf16 end-to-end upstream to
            # delete this single remaining boundary pass (transpose+cast fuse).
            x_nhwc = jnp.transpose(tensors, (0, 2, 3, 1)).astype(jnp.bfloat16)
        out = {}
        for i, (s, c, (w, b)) in enumerate(
                zip(self.strides, self.num_channels, self.params)):
            feat = patchify_project(x_nhwc, w, b, stride=s,
                                    out_dtype=self.out_dtype)
            if feat.shape[-1] != c:            # only when c > 128 and ragged
                feat = feat[..., :c]
            m = nearest_mask(mask, feat.shape[1], feat.shape[2])
            out[str(i)] = (feat, m)
        return out


# ----------------------------------------------------------------------------
if __name__ == "__main__":
    key = jax.random.PRNGKey(0)
    k_x, k_p = jax.random.split(key)

    B, C, H, W = 2, 4, 32, 32
    strides = [2, 4, 8]
    num_channels = [32, 64, 128]

    x = jax.random.normal(k_x, (B, C, H, W), jnp.float32)

    # padding mask: True on padded pixels (right / bottom padding)
    mask = jnp.zeros((B, H, W), dtype=bool)
    mask = mask.at[0, :, 24:].set(True)
    mask = mask.at[1, 20:, :].set(True)

    backbone = PallasBackboneBase(strides=strides, num_channels=num_channels,
                                  in_channels=C, key=k_p)
    forward = jax.jit(lambda t, m: backbone(t, m))
    out = forward(x, mask)

    # pure-JAX reference of the synthesized body (patchify + matmul + bias + ReLU)
    x_ref = jnp.transpose(x, (0, 2, 3, 1)).astype(jnp.bfloat16).astype(jnp.float32)
    for i, (s, c) in enumerate(zip(strides, num_channels)):
        feat, m = out[str(i)]
        jax.block_until_ready(feat)
        jax.block_until_ready(m)
        h, wo = H // s, W // s
        assert feat.shape == (B, h, wo, c), feat.shape
        assert m.shape == (B, h, wo)
        assert m.dtype == jnp.bool_
        assert bool(jnp.all(m == mask[:, ::s, ::s]))

        w_skn, b_pad = backbone.params[i]
        wt = w_skn.astype(jnp.float32).reshape(s * s * C, -1)[:, :c]
        p = x_ref.reshape(B, h, s, wo, s, C).transpose(0, 1, 3, 2, 4, 5)
        p = p.reshape(B * h * wo, s * s * C)
        ref = jnp.maximum(p @ wt + b_pad[:, :c], 0.0).reshape(B, h, wo, c)
        assert bool(jnp.allclose(feat.astype(jnp.float32), ref,
                                 rtol=2e-2, atol=2e-2)), f"level {i} mismatch"

    print("KERNEL_OK")
</pallas_src>

<mosaic_0001>
module attributes {stable_mosaic.version = 11 : i64} {
  func.func @_patch_proj_kernel(%arg0: i32, %arg1: i32, %arg2: memref<4x1x8x16xbf16, #tpu.memory_space<vmem>>, %arg3: memref<4x16x64xbf16, #tpu.memory_space<vmem>>, %arg4: memref<1x64xf32, #tpu.memory_space<vmem>>, %arg5: memref<32x64xbf16, #tpu.memory_space<vmem>>, %arg6: memref<32x64xf32, #tpu.memory_space<vmem>>) attributes {dimension_semantics = [#tpu.dimension_semantics<parallel>, #tpu.dimension_semantics<arbitrary>], iteration_bounds = array<i64: 4, 4>, scalar_prefetch = 0 : i64, scratch_operands = 1 : i64, tpu.core_type = #tpu.core_type<tc>, window_params = [{transform_indices = @transform_0, window_bounds = array<i64: 4, 1, 8, 16>}, {pipeline_mode = #tpu.pipeline_mode<synchronous>, transform_indices = @transform_1, window_bounds = array<i64: 4, 16, 64>}, {pipeline_mode = #tpu.pipeline_mode<synchronous>, transform_indices = @transform_2, window_bounds = array<i64: 1, 64>}, {transform_indices = @transform_3, window_bounds = array<i64: 32, 64>}]} {
    %c0_i32 = arith.constant 0 : i32
    %0 = arith.cmpi eq, %arg1, %c0_i32 : i32
    %1 = arith.extui %0 : i1 to i32
    %c0_i32_0 = arith.constant 0 : i32
    %2 = arith.cmpi ne, %1, %c0_i32_0 : i32
    scf.if %2 {
      %cst_11 = arith.constant 0.000000e+00 : f32
      %16 = vector.broadcast %cst_11 : f32 to vector<32x64xf32>
      %c0_12 = arith.constant 0 : index
      %c0_13 = arith.constant 0 : index
      %17 = vector.load %arg6[%c0_12, %c0_13] : memref<32x64xf32, #tpu.memory_space<vmem>>, vector<32x64xf32>
      tpu.vector_store %arg6[%c0_12, %c0_13], %16 {strides = array<i32>} : memref<32x64xf32, #tpu.memory_space<vmem>>, vector<32x64xf32>,
    } else {
    }
    %3 = arith.index_cast %arg1 : i32 to index
    %c0 = arith.constant 0 : index
    %c0_1 = arith.constant 0 : index
    %4 = vector.load %arg3[%3, %c0, %c0_1] : memref<4x16x64xbf16, #tpu.memory_space<vmem>>, vector<1x16x64xbf16>
    %5 = vector.shape_cast %4 : vector<1x16x64xbf16> to vector<16x64xbf16>
    %c0_2 = arith.constant 0 : index
    %c0_3 = arith.constant 0 : index
    %c0_4 = arith.constant 0 : index
    %c0_5 = arith.constant 0 : index
    %6 = vector.load %arg2[%c0_2, %c0_3, %c0_4, %c0_5] : memref<4x1x8x16xbf16, #tpu.memory_space<vmem>>, vector<4x1x8x16xbf16>
    %7 = vector.shape_cast %6 : vector<4x1x8x16xbf16> to vector<4x8x16xbf16>
    %8 = vector.shape_cast %7 : vector<4x8x16xbf16> to vector<32x16xbf16>
    %c0_6 = arith.constant 0 : index
    %c0_7 = arith.constant 0 : index
    %9 = vector.load %arg6[%c0_6, %c0_7] : memref<32x64xf32, #tpu.memory_space<vmem>>, vector<32x64xf32>
    %cst = arith.constant dense<0.000000e+00> : vector<32x64xf32>
    %10 = tpu.matmul %8, %5, %cst {dimension_numbers = #tpu.dot_dimension_numbers<[1], [0], [0], [1], [0, 0, 1, 1], [], []>} : vector<32x16xbf16>, vector<16x64xbf16>, vector<32x64xf32> -> vector<32x64xf32>
    %11 = arith.addf %9, %10 : vector<32x64xf32>
    %c0_8 = arith.constant 0 : index
    %c0_9 = arith.constant 0 : index
    %12 = vector.load %arg6[%c0_8, %c0_9] : memref<32x64xf32, #tpu.memory_space<vmem>>, vector<32x64xf32>
    tpu.vector_store %arg6[%c0_8, %c0_9], %11 {strides = array<i32>} : memref<32x64xf32, #tpu.memory_space<vmem>>, vector<32x64xf32>,
    %c3_i32 = arith.constant 3 : i32
    %13 = arith.cmpi eq, %arg1, %c3_i32 : i32
    %14 = arith.extui %13 : i1 to i32
    %c0_i32_10 = arith.constant 0 : i32
    %15 = arith.cmpi ne, %14, %c0_i32_10 : i32
    scf.if %15 {
      %c0_11 = arith.constant 0 : index
      %c0_12 = arith.constant 0 : index
      %16 = vector.load %arg6[%c0_11, %c0_12] : memref<32x64xf32, #tpu.memory_space<vmem>>, vector<32x64xf32>
      %c0_13 = arith.constant 0 : index
      %c0_14 = arith.constant 0 : index
      %17 = vector.load %arg4[%c0_13, %c0_14] : memref<1x64xf32, #tpu.memory_space<vmem>>, vector<1x64xf32>
      %18 = vector.broadcast %17 : vector<1x64xf32> to vector<32x64xf32>
      %19 = arith.addf %16, %18 : vector<32x64xf32>
      %cst_15 = arith.constant 0.000000e+00 : f32
      %20 = vector.broadcast %cst_15 : f32 to vector<32x64xf32>
      %21 = arith.maximumf %19, %20 : vector<32x64xf32>
      %22 = arith.truncf %21 : vector<32x64xf32> to vector<32x64xbf16>
      %c0_16 = arith.constant 0 : index
      %c0_17 = arith.constant 0 : index
      %23 = vector.load %arg5[%c0_16, %c0_17] : memref<32x64xbf16, #tpu.memory_space<vmem>>, vector<32x64xbf16>
      tpu.vector_store %arg5[%c0_16, %c0_17], %22 {strides = array<i32>} : memref<32x64xbf16, #tpu.memory_space<vmem>>, vector<32x64xbf16>,
    } else {
    }
    return
  }
  func.func @transform_0(%arg0: i32, %arg1: i32) -> (i32, i32, i32, i32) {
    %c0_i32 = arith.constant 0 : i32
    %c0_i32_0 = arith.constant 0 : i32
    %c0_i32_1 = arith.constant 0 : i32
    return %arg0, %arg1, %c0_i32, %c0_i32_0 : i32, i32, i32, i32
  }
  func.func @transform_1(%arg0: i32, %arg1: i32) -> (i32, i32, i32) {
    %c0_i32 = arith.constant 0 : i32
    %c0_i32_0 = arith.constant 0 : i32
    %c0_i32_1 = arith.constant 0 : i32
    %c0_i32_2 = arith.constant 0 : i32
    return %c0_i32, %c0_i32_0, %c0_i32_1 : i32, i32, i32
  }
  func.func @transform_2(%arg0: i32, %arg1: i32) -> (i32, i32) {
    %c0_i32 = arith.constant 0 : i32
    %c0_i32_0 = arith.constant 0 : i32
    %c0_i32_1 = arith.constant 0 : i32
    return %c0_i32, %c0_i32_0 : i32, i32
  }
  func.func @transform_3(%arg0: i32, %arg1: i32) -> (i32, i32) {
    %c0_i32 = arith.constant 0 : i32
    %c0_i32_0 = arith.constant 0 : i32
    return %arg0, %c0_i32 : i32, i32
  }
}

module attributes {stable_mosaic.version = 11 : i64} {
  func.func @_patch_proj_kernel(%arg0: i32, %arg1: i32, %arg2: memref<2x1x4x32xbf16, #tpu.memory_space<vmem>>, %arg3: memref<8x32x128xbf16, #tpu.memory_space<vmem>>, %arg4: memref<1x128xf32, #tpu.memory_space<vmem>>, %arg5: memref<8x128xbf16, #tpu.memory_space<vmem>>, %arg6: memref<8x128xf32, #tpu.memory_space<vmem>>) attributes {dimension_semantics = [#tpu.dimension_semantics<parallel>, #tpu.dimension_semantics<arbitrary>], iteration_bounds = array<i64: 4, 8>, scalar_prefetch = 0 : i64, scratch_operands = 1 : i64, tpu.core_type = #tpu.core_type<tc>, window_params = [{transform_indices = @transform_0, window_bounds = array<i64: 2, 1, 4, 32>}, {pipeline_mode = #tpu.pipeline_mode<synchronous>, transform_indices = @transform_1, window_bounds = array<i64: 8, 32, 128>}, {pipeline_mode = #tpu.pipeline_mode<synchronous>, transform_indices = @transform_2, window_bounds = array<i64: 1, 128>}, {transform_indices = @transform_3, window_bounds = array<i64: 8, 128>}]} {
    %c0_i32 = arith.constant 0 : i32
    %0 = arith.cmpi eq, %arg1, %c0_i32 : i32
    %1 = arith.extui %0 : i1 to i32
    %c0_i32_0 = arith.constant 0 : i32
    %2 = arith.cmpi ne, %1, %c0_i32_0 : i32
    scf.if %2 {
      %cst_18 = arith.constant 0.000000e+00 : f32
      %21 = vector.broadcast %cst_18 : f32 to vector<8x128xf32>
      %c0_19 = arith.constant 0 : index
      %c0_20 = arith.constant 0 : index
      %22 = vector.load %arg6[%c0_19, %c0_20] : memref<8x128xf32, #tpu.memory_space<vmem>>, vector<8x128xf32>
      tpu.vector_store %arg6[%c0_19, %c0_20], %21 {strides = array<i32>} : memref<8x128xf32, #tpu.memory_space<vmem>>, vector<8x128xf32>,
    } else {
    }
    %3 = arith.index_cast %arg1 : i32 to index
    %c0 = arith.constant 0 : index
    %c0_1 = arith.constant 0 : index
    %4 = vector.load %arg3[%3, %c0, %c0_1] : memref<8x32x128xbf16, #tpu.memory_space<vmem>>, vector<1x32x128xbf16>
    %5 = vector.shape_cast %4 : vector<1x32x128xbf16> to vector<32x128xbf16>
    %c0_2 = arith.constant 0 : index
    %c0_3 = arith.constant 0 : index
    %6 = vector.load %arg6[%c0_2, %c0_3] : memref<8x128xf32, #tpu.memory_space<vmem>>, vector<4x128xf32>
    %c0_4 = arith.constant 0 : index
    %c0_5 = arith.constant 0 : index
    %c0_6 = arith.constant 0 : index
    %c0_7 = arith.constant 0 : index
    %7 = vector.load %arg2[%c0_4, %c0_5, %c0_6, %c0_7] : memref<2x1x4x32xbf16, #tpu.memory_space<vmem>>, vector<1x1x4x32xbf16>
    %8 = vector.shape_cast %7 : vector<1x1x4x32xbf16> to vector<4x32xbf16>
    %cst = arith.constant dense<0.000000e+00> : vector<4x128xf32>
    %9 = tpu.matmul %8, %5, %cst {dimension_numbers = #tpu.dot_dimension_numbers<[1], [0], [0], [1], [0, 0, 1, 1], [], []>} : vector<4x32xbf16>, vector<32x128xbf16>, vector<4x128xf32> -> vector<4x128xf32>
    %10 = arith.addf %6, %9 : vector<4x128xf32>
    %c0_8 = arith.constant 0 : index
    %c0_9 = arith.constant 0 : index
    %11 = vector.load %arg6[%c0_8, %c0_9] : memref<8x128xf32, #tpu.memory_space<vmem>>, vector<4x128xf32>
    tpu.vector_store %arg6[%c0_8, %c0_9], %10 {strides = array<i32>} : memref<8x128xf32, #tpu.memory_space<vmem>>, vector<4x128xf32>,
    %c4 = arith.constant 4 : index
    %c0_10 = arith.constant 0 : index
    %12 = vector.load %arg6[%c4, %c0_10] : memref<8x128xf32, #tpu.memory_space<vmem>>, vector<4x128xf32>
    %c1 = arith.constant 1 : index
    %c0_11 = arith.constant 0 : index
    %c0_12 = arith.constant 0 : index
    %c0_13 = arith.constant 0 : index
    %13 = vector.load %arg2[%c1, %c0_11, %c0_12, %c0_13] : memref<2x1x4x32xbf16, #tpu.memory_space<vmem>>, vector<1x1x4x32xbf16>
    %14 = vector.shape_cast %13 : vector<1x1x4x32xbf16> to vector<4x32xbf16>
    %cst_14 = arith.constant dense<0.000000e+00> : vector<4x128xf32>
    %15 = tpu.matmul %14, %5, %cst_14 {dimension_numbers = #tpu.dot_dimension_numbers<[1], [0], [0], [1], [0, 0, 1, 1], [], []>} : vector<4x32xbf16>, vector<32x128xbf16>, vector<4x128xf32> -> vector<4x128xf32>
    %16 = arith.addf %12, %15 : vector<4x128xf32>
    %c4_15 = arith.constant 4 : index
    %c0_16 = arith.constant 0 : index
    %17 = vector.load %arg6[%c4_15, %c0_16] : memref<8x128xf32, #tpu.memory_space<vmem>>, vector<4x128xf32>
    tpu.vector_store %arg6[%c4_15, %c0_16], %16 {strides = array<i32>} : memref<8x128xf32, #tpu.memory_space<vmem>>, vector<4x128xf32>,
    %c7_i32 = arith.constant 7 : i32
    %18 = arith.cmpi eq, %arg1, %c7_i32 : i32
    %19 = arith.extui %18 : i1 to i32
    %c0_i32_17 = arith.constant 0 : i32
    %20 = arith.cmpi ne, %19, %c0_i32_17 : i32
    scf.if %20 {
      %c0_18 = arith.constant 0 : index
      %c0_19 = arith.constant 0 : index
      %21 = vector.load %arg6[%c0_18, %c0_19] : memref<8x128xf32, #tpu.memory_space<vmem>>, vector<8x128xf32>
      %c0_20 = arith.constant 0 : index
      %c0_21 = arith.constant 0 : index
      %22 = vector.load %arg4[%c0_20, %c0_21] : memref<1x128xf32, #tpu.memory_space<vmem>>, vector<1x128xf32>
      %23 = vector.broadcast %22 : vector<1x128xf32> to vector<8x128xf32>
      %24 = arith.addf %21, %23 : vector<8x128xf32>
      %cst_22 = arith.constant 0.000000e+00 : f32
      %25 = vector.broadcast %cst_22 : f32 to vector<8x128xf32>
      %26 = arith.maximumf %24, %25 : vector<8x128xf32>
      %27 = arith.truncf %26 : vector<8x128xf32> to vector<8x128xbf16>
      %c0_23 = arith.constant 0 : index
      %c0_24 = arith.constant 0 : index
      %28 = vector.load %arg5[%c0_23, %c0_24] : memref<8x128xbf16, #tpu.memory_space<vmem>>, vector<8x128xbf16>
      tpu.vector_store %arg5[%c0_23, %c0_24], %27 {strides = array<i32>} : memref<8x128xbf16, #tpu.memory_space<vmem>>, vector<8x128xbf16>,
    } else {
    }
    return
  }
  func.func @transform_0(%arg0: i32, %arg1: i32) -> (i32, i32, i32, i32) {
    %c0_i32 = arith.constant 0 : i32
    %c0_i32_0 = arith.constant 0 : i32
    %c0_i32_1 = arith.constant 0 : i32
    return %arg0, %arg1, %c0_i32, %c0_i32_0 : i32, i32, i32, i32
  }
  func.func @transform_1(%arg0: i32, %arg1: i32) -> (i32, i32, i32) {
    %c0_i32 = arith.constant 0 : i32
    %c0_i32_0 = arith.constant 0 : i32
    %c0_i32_1 = arith.constant 0 : i32
    %c0_i32_2 = arith.constant 0 : i32
    return %c0_i32, %c0_i32_0, %c0_i32_1 : i32, i32, i32
  }
  func.func @transform_2(%arg0: i32, %arg1: i32) -> (i32, i32) {
    %c0_i32 = arith.constant 0 : i32
    %c0_i32_0 = arith.constant 0 : i32
    %c0_i32_1 = arith.constant 0 : i32
    return %c0_i32, %c0_i32_0 : i32, i32
  }
  func.func @transform_3(%arg0: i32, %arg1: i32) -> (i32, i32) {
    %c0_i32 = arith.constant 0 : i32
    %c0_i32_0 = arith.constant 0 : i32
    return %arg0, %c0_i32 : i32, i32
  }
}

module attributes {stable_mosaic.version = 11 : i64} {
  func.func @_patch_proj_kernel(%arg0: i32, %arg1: i32, %arg2: memref<8x1x16x8xbf16, #tpu.memory_space<vmem>>, %arg3: memref<2x8x32xbf16, #tpu.memory_space<vmem>>, %arg4: memref<1x32xf32, #tpu.memory_space<vmem>>, %arg5: memref<128x32xbf16, #tpu.memory_space<vmem>>, %arg6: memref<128x32xf32, #tpu.memory_space<vmem>>) attributes {dimension_semantics = [#tpu.dimension_semantics<parallel>, #tpu.dimension_semantics<arbitrary>], iteration_bounds = array<i64: 4, 2>, scalar_prefetch = 0 : i64, scratch_operands = 1 : i64, tpu.core_type = #tpu.core_type<tc>, window_params = [{transform_indices = @transform_0, window_bounds = array<i64: 8, 1, 16, 8>}, {pipeline_mode = #tpu.pipeline_mode<synchronous>, transform_indices = @transform_1, window_bounds = array<i64: 2, 8, 32>}, {pipeline_mode = #tpu.pipeline_mode<synchronous>, transform_indices = @transform_2, window_bounds = array<i64: 1, 32>}, {transform_indices = @transform_3, window_bounds = array<i64: 128, 32>}]} {
    %c0_i32 = arith.constant 0 : i32
    %0 = arith.cmpi eq, %arg1, %c0_i32 : i32
    %1 = arith.extui %0 : i1 to i32
    %c0_i32_0 = arith.constant 0 : i32
    %2 = arith.cmpi ne, %1, %c0_i32_0 : i32
    scf.if %2 {
      %cst_11 = arith.constant 0.000000e+00 : f32
      %16 = vector.broadcast %cst_11 : f32 to vector<128x32xf32>
      %c0_12 = arith.constant 0 : index
      %c0_13 = arith.constant 0 : index
      %17 = vector.load %arg6[%c0_12, %c0_13] : memref<128x32xf32, #tpu.memory_space<vmem>>, vector<128x32xf32>
      tpu.vector_store %arg6[%c0_12, %c0_13], %16 {strides = array<i32>} : memref<128x32xf32, #tpu.memory_space<vmem>>, vector<128x32xf32>,
    } else {
    }
    %3 = arith.index_cast %arg1 : i32 to index
    %c0 = arith.constant 0 : index
    %c0_1 = arith.constant 0 : index
    %4 = vector.load %arg3[%3, %c0, %c0_1] : memref<2x8x32xbf16, #tpu.memory_space<vmem>>, vector<1x8x32xbf16>
    %5 = vector.shape_cast %4 : vector<1x8x32xbf16> to vector<8x32xbf16>
    %c0_2 = arith.constant 0 : index
    %c0_3 = arith.constant 0 : index
    %c0_4 = arith.constant 0 : index
    %c0_5 = arith.constant 0 : index
    %6 = vector.load %arg2[%c0_2, %c0_3, %c0_4, %c0_5] : memref<8x1x16x8xbf16, #tpu.memory_space<vmem>>, vector<8x1x16x8xbf16>
    %7 = vector.shape_cast %6 : vector<8x1x16x8xbf16> to vector<8x16x8xbf16>
    %8 = vector.shape_cast %7 : vector<8x16x8xbf16> to vector<128x8xbf16>
    %c0_6 = arith.constant 0 : index
    %c0_7 = arith.constant 0 : index
    %9 = vector.load %arg6[%c0_6, %c0_7] : memref<128x32xf32, #tpu.memory_space<vmem>>, vector<128x32xf32>
    %cst = arith.constant dense<0.000000e+00> : vector<128x32xf32>
    %10 = tpu.matmul %8, %5, %cst {dimension_numbers = #tpu.dot_dimension_numbers<[1], [0], [0], [1], [0, 0, 1, 1], [], []>} : vector<128x8xbf16>, vector<8x32xbf16>, vector<128x32xf32> -> vector<128x32xf32>
    %11 = arith.addf %9, %10 : vector<128x32xf32>
    %c0_8 = arith.constant 0 : index
    %c0_9 = arith.constant 0 : index
    %12 = vector.load %arg6[%c0_8, %c0_9] : memref<128x32xf32, #tpu.memory_space<vmem>>, vector<128x32xf32>
    tpu.vector_store %arg6[%c0_8, %c0_9], %11 {strides = array<i32>} : memref<128x32xf32, #tpu.memory_space<vmem>>, vector<128x32xf32>,
    %c1_i32 = arith.constant 1 : i32
    %13 = arith.cmpi eq, %arg1, %c1_i32 : i32
    %14 = arith.extui %13 : i1 to i32
    %c0_i32_10 = arith.constant 0 : i32
    %15 = arith.cmpi ne, %14, %c0_i32_10 : i32
    scf.if %15 {
      %c0_11 = arith.constant 0 : index
      %c0_12 = arith.constant 0 : index
      %16 = vector.load %arg6[%c0_11, %c0_12] : memref<128x32xf32, #tpu.memory_space<vmem>>, vector<128x32xf32>
      %c0_13 = arith.constant 0 : index
      %c0_14 = arith.constant 0 : index
      %17 = vector.load %arg4[%c0_13, %c0_14] : memref<1x32xf32, #tpu.memory_space<vmem>>, vector<1x32xf32>
      %18 = vector.broadcast %17 : vector<1x32xf32> to vector<128x32xf32>
      %19 = arith.addf %16, %18 : vector<128x32xf32>
      %cst_15 = arith.constant 0.000000e+00 : f32
      %20 = vector.broadcast %cst_15 : f32 to vector<128x32xf32>
      %21 = arith.maximumf %19, %20 : vector<128x32xf32>
      %22 = arith.truncf %21 : vector<128x32xf32> to vector<128x32xbf16>
      %c0_16 = arith.constant 0 : index
      %c0_17 = arith.constant 0 : index
      %23 = vector.load %arg5[%c0_16, %c0_17] : memref<128x32xbf16, #tpu.memory_space<vmem>>, vector<128x32xbf16>
      tpu.vector_store %arg5[%c0_16, %c0_17], %22 {strides = array<i32>} : memref<128x32xbf16, #tpu.memory_space<vmem>>, vector<128x32xbf16>,
    } else {
    }
    return
  }
  func.func @transform_0(%arg0: i32, %arg1: i32) -> (i32, i32, i32, i32) {
    %c0_i32 = arith.constant 0 : i32
    %c0_i32_0 = arith.constant 0 : i32
    %c0_i32_1 = arith.constant 0 : i32
    return %arg0, %arg1, %c0_i32, %c0_i32_0 : i32, i32, i32, i32
  }
  func.func @transform_1(%arg0: i32, %arg1: i32) -> (i32, i32, i32) {
    %c0_i32 = arith.constant 0 : i32
    %c0_i32_0 = arith.constant 0 : i32
    %c0_i32_1 = arith.constant 0 : i32
    %c0_i32_2 = arith.constant 0 : i32
    return %c0_i32, %c0_i32_0, %c0_i32_1 : i32, i32, i32
  }
  func.func @transform_2(%arg0: i32, %arg1: i32) -> (i32, i32) {
    %c0_i32 = arith.constant 0 : i32
    %c0_i32_0 = arith.constant 0 : i32
    %c0_i32_1 = arith.constant 0 : i32
    return %c0_i32, %c0_i32_0 : i32, i32
  }
  func.func @transform_3(%arg0: i32, %arg1: i32) -> (i32, i32) {
    %c0_i32 = arith.constant 0 : i32
    %c0_i32_0 = arith.constant 0 : i32
    return %arg0, %c0_i32 : i32, i32
  }
}

</mosaic_0001>

<llo_original>
// kernel: _lambda_.4
$region0: #{_lambda_.4}
  #allocation0 [shape = 'u32[]', space=smem, size = 0x4, offset = 0x4, fixed_abs, tag = 'smem constant byte address 0x4 - core index']
  #allocation1 [shape = 'u32[72,128]{1,0:T(1,128)}', space=vmem, size = 0x9000, scoped, tag = 'internal scratch']
  #allocation2 [shape = 'f32[32,64]{1,0:T(8,128)}', space=vmem, size = 0x4000, scoped, tag = 'scratch operand']
  %s0 = inlined_call_operand.vmem [shape: bf16[16,4,8,16], index: 0, kind: input, shape index: {}]
  %s1 = inlined_call_operand.vmem [shape: bf16[4,16,64], index: 1, kind: input, shape index: {}]
  %s2 = inlined_call_operand.vmem [shape: f32[1,64], index: 2, kind: input, shape index: {}]
  %s3 = inlined_call_operand.hbm [shape: bf16[128,64], index: 3, kind: output, shape index: {}]
  %s4 = sld [smem:[#allocation0]]
  $region94: #{_lambda_.4} parent=0
    _
  %s6 = ssub.s32 1, %s4
  %s7 = scalar_select 0, %s6, %s4
  $region1: #{_lambda_.4} parent=0
    #allocation3 [shape = 'u8[16384]{0}', space=vmem, size = 0x4000, scoped, tag = 'input window, operand 0']
    #allocation4 [shape = 'u8[16384]{0}', space=vmem, size = 0x4000, scoped, tag = 'output window, operand 0']
    #allocation5 [shape = 's32[2]{0}', space=sflag, size = 0x8, scoped, tag = 'scoped memory for _lambda_.4']
    %8 = vsyncpa [#allocation5], 0
    %s9 = scalar_lea.sflag [#allocation5], 1
    %10 = vsyncpa %s9, 0
    loop: start=0, step=1, limit=18
    $region2: #{_lambda_.4} parent=1 // loop_pre_header
      _
    $region3: #{_lambda_.4} parent=1 // loop_header
      %s12 = sphi 0, %s16
      %p13 = scmp.ge.s32.totalorder %s12, 18
      %s19 = sphi 0, %s31
      %s20 = sphi 0, %s27
      %s21 = sphi 0, %s19
      %s22 = sphi 0, %s20
      %s23 = sphi 0, %s21
      %s24 = sphi 0, %s22
      %s36 = sphi 0, %s38
      %s39 = sphi 0, %s36
      %s40 = sphi 0, %s39
      %s56 = sphi 0, %s40
      %s60 = sphi 0, %s60
      %s62 = sphi 0, %s60
      %s63 = sphi 0, %s62
      %s77 = sphi 0, %s63
      %s81 = sphi 0, %s81
      %s83 = sphi 0, %s81
      %s84 = sphi 0, %s83
      %s98 = sphi 0, %s84
      %s104 = sphi 0, %s106
      %s107 = sphi 0, %s104
      %s108 = sphi 0, %s107
      %s124 = sphi 0, %s108
    $region4: #{_lambda_.4} parent=1 // loop_header_branch
      %15 = sbr.rel (%p13) target = $region8
    $region5: #{_lambda_.4} parent=1 // loop_body
      %s17 = ssub.s32 %s12, 1
      %s18 = ssub.s32 %s12, 2
      %s25 = sadd.s32 1, %s20
      %p26 = scmp.ge.s32.totalorder %s25, 4
      %s27 = scalar_select %p26, 0, %s25
      %s28 = sadd.s32 1, %s19
      %s29 = scalar_select %p26, %s28, %s19
      %p30 = scmp.ge.s32.totalorder %s29, 4
      %s31 = scalar_select %p30, 0, %s29
      %s32 = ssub.s32 %s19, %s31
      %s33 = ssub.s32 %s20, %s27
      %s34 = sor.u32 %s32, %s33
      %p35 = scmp.eq.s32.totalorder %s34, 0
      %s37 = sadd.s32 %s36, 1
      %s38 = scalar_select %p35, %s36, %s37
      %p41 = pneg %p35
      %p42 = scmp.eq.s32.totalorder %s12, 15
      %p43 = por %p41, %p42
      %p44 = scmp.ne.s32.totalorder %s36, %s39
      %p45 = scmp.eq.s32.totalorder %s12, 0
      %p46 = por %p44, %p45
      %p47 = scmp.ne.s32.totalorder %s36, %s39
      %p48 = scmp.eq.s32.totalorder %s17, 15
      %p49 = por %p47, %p48
      %p50 = scmp.ne.s32.totalorder %s39, %s40
      %p51 = scmp.eq.s32.totalorder %s17, 0
      %p52 = por %p50, %p51
      %p53 = scmp.ne.s32.totalorder %s39, %s40
      %p54 = scmp.eq.s32.totalorder %s18, 15
      %p55 = por %p53, %p54
      %p57 = scmp.ne.s32.totalorder %s40, %s56
      %p58 = scmp.eq.s32.totalorder %s18, 0
      %p59 = por %p57, %p58
      %s61 = sadd.s32 %s60, 1
      %p64 = scmp.eq.s32.totalorder %s12, 15
      %p65 = scmp.ne.s32.totalorder %s60, %s62
      %p66 = scmp.eq.s32.totalorder %s12, 0
      %p67 = por %p65, %p66
      %p68 = scmp.ne.s32.totalorder %s60, %s62
      %p69 = scmp.eq.s32.totalorder %s17, 15
      %p70 = por %p68, %p69
      %p71 = scmp.ne.s32.totalorder %s62, %s63
      %p72 = scmp.eq.s32.totalorder %s17, 0
      %p73 = por %p71, %p72
      %p74 = scmp.ne.s32.totalorder %s62, %s63
      %p75 = scmp.eq.s32.totalorder %s18, 15
      %p76 = por %p74, %p75
      %p78 = scmp.ne.s32.totalorder %s63, %s77
      %p79 = scmp.eq.s32.totalorder %s18, 0
      %p80 = por %p78, %p79
      %s82 = sadd.s32 %s81, 1
      %p85 = scmp.eq.s32.totalorder %s12, 15
      %p86 = scmp.ne.s32.totalorder %s81, %s83
      %p87 = scmp.eq.s32.totalorder %s12, 0
      %p88 = por %p86, %p87
      %p89 = scmp.ne.s32.totalorder %s81, %s83
      %p90 = scmp.eq.s32.totalorder %s17, 15
      %p91 = por %p89, %p90
      %p92 = scmp.ne.s32.totalorder %s83, %s84
      %p93 = scmp.eq.s32.totalorder %s17, 0
      %p94 = por %p92, %p93
      %p95 = scmp.ne.s32.totalorder %s83, %s84
      %p96 = scmp.eq.s32.totalorder %s18, 15
      %p97 = por %p95, %p96
      %p99 = scmp.ne.s32.totalorder %s84, %s98
      %p100 = scmp.eq.s32.totalorder %s18, 0
      %p101 = por %p99, %p100
      %s102 = ssub.s32 %s19, %s31
      %p103 = scmp.eq.s32.totalorder %s102, 0
      %s105 = sadd.s32 %s104, 1
      %s106 = scalar_select %p103, %s104, %s105
      %p109 = pneg %p103
      %p110 = scmp.eq.s32.totalorder %s12, 15
      %p111 = por %p109, %p110
      %p112 = scmp.ne.s32.totalorder %s104, %s107
      %p113 = scmp.eq.s32.totalorder %s12, 0
      %p114 = por %p112, %p113
      %p115 = scmp.ne.s32.totalorder %s104, %s107
      %p116 = scmp.eq.s32.totalorder %s17, 15
      %p117 = por %p115, %p116
      %p118 = scmp.ne.s32.totalorder %s107, %s108
      %p119 = scmp.eq.s32.totalorder %s17, 0
      %p120 = por %p118, %p119
      %p121 = scmp.ne.s32.totalorder %s107, %s108
      %p122 = scmp.eq.s32.totalorder %s18, 15
      %p123 = por %p121, %p122
      %p125 = scmp.ne.s32.totalorder %s108, %s124
      %p126 = scmp.eq.s32.totalorder %s18, 0
      %p127 = por %p125, %p126
      %p128 = scmp.le.s32.totalorder 1, %s12
      %p129 = scmp.lt.s32.totalorder %s12, 17
      %p130 = pnand %p128, %p129
      %p131 = pneg %p130
      // Predicated region
      $region9: #{_lambda_.4} parent=5 // pred_check
        _
      $region10: #{_lambda_.4} parent=5 // pred_check_branch
        %133 = sbr.rel (%p130) target = $region12
      $region11: #{_lambda_.4} parent=5 // pred_region
        %s134 = ssub.s32 %s12, 1
        // Predicated region
        $region13: #{_lambda_.4} parent=11 // pred_check
          %p135 = pneg %p73
        $region14: #{_lambda_.4} parent=11 // pred_check_branch
          %137 = sbr.rel (%p135) target = $region16
        $region15: #{_lambda_.4} parent=11 // pred_region
          _
        $region16: #{_lambda_.4} parent=11 // pred_fallthru
          _
        // Predicated region
        $region17: #{_lambda_.4} parent=11 // pred_check
          %p138 = pneg %p94
        $region18: #{_lambda_.4} parent=11 // pred_check_branch
          %140 = sbr.rel (%p138) target = $region20
        $region19: #{_lambda_.4} parent=11 // pred_region
          _
        $region20: #{_lambda_.4} parent=11 // pred_fallthru
          _
      $region12: #{_lambda_.4} parent=5 // pred_fallthru
        _
      %p141 = scmp.lt.s32.totalorder %s12, 16
      // Predicated region
      $region21: #{_lambda_.4} parent=5 // pred_check
        %p142 = pneg %p141
      $region22: #{_lambda_.4} parent=5 // pred_check_branch
        %144 = sbr.rel (%p142) target = $region24
      $region23: #{_lambda_.4} parent=5 // pred_region
        // Predicated region
        $region25: #{_lambda_.4} parent=23 // pred_check
          %p145 = pneg %p46
        $region26: #{_lambda_.4} parent=23 // pred_check_branch
          %147 = sbr.rel (%p145) target = $region28
        $region27: #{_lambda_.4} parent=23 // pred_region
          %s148 = sand.u32 %s36, 1
          %s149 = sand.u32 %s36, 1
          %s150 = smul.addr %s149, 16
          %s151 = scalar_lea.vmem [#allocation3], %s150
          %s152 = smul.u32 4, %s19
          %s153 = smul.addr %s152, 4
          %s154 = sadd.s32 %s20, %s153
          %s155 = smul.addr %s154, 4
          %s156 = scalar_lea.vmem %s0, %s155
          // Predicated region
          $region29: #{_lambda_.4} parent=27 // pred_check
            _
          $region30: #{_lambda_.4} parent=27 // pred_check_branch
            %158 = sbr.rel (0) target = $region32
          $region31: #{_lambda_.4} parent=27 // pred_region
            // Predicated region
            $region33: #{_lambda_.4} parent=31 // pred_check
              _
            $region34: #{_lambda_.4} parent=31 // pred_check_branch
              %160 = sbr.rel target = $region36
            $region35: #{_lambda_.4} parent=31 // pred_region
              // Predicated region
              $region48: #{_lambda_.4} parent=35 // pred_check
                _
              $region49: #{_lambda_.4} parent=35 // pred_check_branch
                %182 = sbr.rel (0) target = $region51
              $region50: #{_lambda_.4} parent=35 // pred_region
                loop: start=0, step=1, limit=1
                $region52: #{_lambda_.4} parent=50 // loop_pre_header
                  _
                $region53: #{_lambda_.4} parent=50 // loop_header
                  %s184 = sphi 0, %s188
                  %p185 = scmp.ge.s32.totalorder %s184, 1
                  %s189 = sphi %s156, %s156
                  %s190 = sphi %s151, %s151
                $region54: #{_lambda_.4} parent=50 // loop_header_branch
                  %187 = sbr.rel (%p185) target = $region58
                $region55: #{_lambda_.4} parent=50 // loop_body
                  _
                $region56: #{_lambda_.4} parent=50 // loop_footer
                  %s188 = sadd.s32 1, %s184
                $region57: #{_lambda_.4} parent=50 // loop_footer_branch
                  %183 = sbr.rel target = $region53
                $region58: #{_lambda_.4} parent=50 // loop_exit
                  _
                %s192 = ssub.s32 16, 1
                loop: start=0, step=1, limit=1
                $region59: #{_lambda_.4} parent=50 // loop_pre_header
                  _
                $region60: #{_lambda_.4} parent=50 // loop_header
                  %s194 = sphi 0, %s198
                  %p195 = scmp.ge.s32.totalorder %s194, 1
                  %s199 = sphi %s156, %s156
                  %s200 = sphi %s151, %s151
                $region61: #{_lambda_.4} parent=50 // loop_header_branch
                  %197 = sbr.rel (%p195) target = $region65
                $region62: #{_lambda_.4} parent=50 // loop_body
                  %v201 = vld [vmem:[%s199] sm:%s192]
                  %202 = vst [vmem:[%s200] sm:%s192] %v201
                  %v203 = vld [vmem:[%s199 + $0x10] sm:%s192]
                  %204 = vst [vmem:[%s200 + $0x4] sm:%s192] %v203
                  %v205 = vld [vmem:[%s199 + $0x20] sm:%s192]
                  %206 = vst [vmem:[%s200 + $0x8] sm:%s192] %v205
                  %v207 = vld [vmem:[%s199 + $0x30] sm:%s192]
                  %208 = vst [vmem:[%s200 + $0xc] sm:%s192] %v207
                $region63: #{_lambda_.4} parent=50 // loop_footer
                  %s198 = sadd.s32 1, %s194
                $region64: #{_lambda_.4} parent=50 // loop_footer_branch
                  %193 = sbr.rel target = $region60
                $region65: #{_lambda_.4} parent=50 // loop_exit
                  _
              $region51: #{_lambda_.4} parent=35 // pred_fallthru
                _
            $region36: #{_lambda_.4} parent=31 // pred_fallthru
              _
            // Predicated region
            $region37: #{_lambda_.4} parent=31 // pred_check
              _
            $region38: #{_lambda_.4} parent=31 // pred_check_branch
              %162 = sbr.rel (0) target = $region40
            $region39: #{_lambda_.4} parent=31 // pred_region
              %s164 = ssub.s32 16, 1
              loop: start=0, step=1, limit=1
              $region41: #{_lambda_.4} parent=39 // loop_pre_header
                _
              $region42: #{_lambda_.4} parent=39 // loop_header
                %s166 = sphi 0, %s170
                %p167 = scmp.ge.s32.totalorder %s166, 1
                %s171 = sphi %s156, %s156
                %s172 = sphi %s151, %s151
              $region43: #{_lambda_.4} parent=39 // loop_header_branch
                %169 = sbr.rel (%p167) target = $region47
              $region44: #{_lambda_.4} parent=39 // loop_body
                %v173 = vld [vmem:[%s171] sm:%s164]
                %174 = vst [vmem:[%s172] sm:%s164] %v173
                %v175 = vld [vmem:[%s171 + $0x10] sm:%s164]
                %176 = vst [vmem:[%s172 + $0x4] sm:%s164] %v175
                %v177 = vld [vmem:[%s171 + $0x20] sm:%s164]
                %178 = vst [vmem:[%s172 + $0x8] sm:%s164] %v177
                %v179 = vld [vmem:[%s171 + $0x30] sm:%s164]
                %180 = vst [vmem:[%s172 + $0xc] sm:%s164] %v179
              $region45: #{_lambda_.4} parent=39 // loop_footer
                %s170 = sadd.s32 1, %s166
              $region46: #{_lambda_.4} parent=39 // loop_footer_branch
                %165 = sbr.rel target = $region42
              $region47: #{_lambda_.4} parent=39 // loop_exit
                _
            $region40: #{_lambda_.4} parent=31 // pred_fallthru
              _
          $region32: #{_lambda_.4} parent=27 // pred_fallthru
            _
          %209 = vnop
        $region28: #{_lambda_.4} parent=23 // pred_fallthru
          _
      $region24: #{_lambda_.4} parent=5 // pred_fallthru
        _
      %p210 = scmp.le.s32.totalorder 1, %s12
      %p211 = scmp.lt.s32.totalorder %s12, 17
      %p212 = pnand %p210, %p211
      %p213 = pneg %p212
      // Predicated region
      $region66: #{_lambda_.4} parent=5 // pred_check
        _
      $region67: #{_lambda_.4} parent=5 // pred_check_branch
        %215 = sbr.rel (%p212) target = $region69
      $region68: #{_lambda_.4} parent=5 // pred_region
        %s216 = ssub.s32 %s12, 1
        %s217 = sand.u32 %s39, 1
        %s218 = sand.u32 %s39, 1
        %s219 = smul.addr %s218, 16
        %s220 = scalar_lea.vmem [#allocation3], %s219
        // Predicated region
        $region70: #{_lambda_.4} parent=68 // pred_check
          %p221 = pneg %p52
        $region71: #{_lambda_.4} parent=68 // pred_check_branch
          %223 = sbr.rel (%p221) target = $region73
        $region72: #{_lambda_.4} parent=68 // pred_region
          _
        $region73: #{_lambda_.4} parent=68 // pred_fallthru
          _
        %s224 = sand.u32 %s39, 1
        %s225 = sand.u32 %s39, 1
        %s226 = smul.addr %s225, 16
        %s227 = scalar_lea.vmem [#allocation3], %s226
        %p228 = pneg %p52
        %p229 = pneg %p49
        %p230 = pneg %p73
        %p231 = pneg %p70
        %p232 = pneg %p94
        %p233 = pneg %p91
        %p234 = pneg %p120
        %p235 = pneg %p117
        %s236 = sand.u32 %s107, 1
        %s237 = scalar_lea.sflag [#allocation5], %s236
        %s238 = sand.u32 %s107, 1
        %s239 = smul.addr %s238, 16
        %s240 = scalar_lea.vmem [#allocation4], %s239
        %s241 = smul.u32 4, %s21
        %s242 = smul.u32 4, %s21
        %p244 = scmp.eq.s32.totalorder %s22, 0
        // Predicated region
        $region74: #{_lambda_.4} parent=68 // pred_check
          %p245 = pneg %p244
        $region75: #{_lambda_.4} parent=68 // pred_check_branch
          %247 = sbr.rel (%p245) target = $region77
        $region76: #{_lambda_.4} parent=68 // pred_region
          %vm248 = vcmask 523264
          %249 = vst.msk [vmem:[#allocation2] sm:$0xff] %vm248, 0.0
          %250 = vst.msk [vmem:[#allocation2 + $0x8] sm:$0xff] %vm248, 0.0
          %251 = vst.msk [vmem:[#allocation2 + $0x10] sm:$0xff] %vm248, 0.0
          %252 = vst.msk [vmem:[#allocation2 + $0x18] sm:$0xff] %vm248, 0.0
        $region77: #{_lambda_.4} parent=68 // pred_fallthru
          _
        %s253 = smul.u32 %s22, 2
        %s254 = smul.addr %s253, 4
        %s255 = scalar_lea.vmem %s1, %s254
        %v256 = vld [vmem:[%s255] sm:$0xf]
        %v257 = vld [vmem:[%s255 + $0x4] sm:$0xf]
        %v258 = vld [vmem:[%s220] sm:$0xf]
        %v259 = vld [vmem:[%s220 + $0x4] sm:$0xf]
        %v260 = vld [vmem:[%s220 + $0x8] sm:$0xf]
        %v261 = vld [vmem:[%s220 + $0xc] sm:$0xf]
        %v262 = vld [vmem:[#allocation2] sm:$0xff]
        %v263 = vld [vmem:[#allocation2 + $0x8] sm:$0xff]
        %v264 = vld [vmem:[#allocation2 + $0x10] sm:$0xff]
        %v265 = vld [vmem:[#allocation2 + $0x18] sm:$0xff]
        %v270 = vunpack.c.l.b16 %v258
        %v271 = vunpack.c.l.b16 %v259
        %v272 = vunpack.c.l.b16 %v260
        %v273 = vunpack.c.l.b16 %v261
        %v274 = vpack.c.b16 %v271, %v270
        %v275 = vpack.c.b16 %v273, %v272
        %v278 = vunpack.c.l.b16 %v256
        %v279 = vunpack.c.l.b16 %v257
        %v280 = vpack.c.b16 %v279, %v278
        %vm282 = vcmask 130048
        %v284 = vsel %vm282, %v274, 0
        %v287 = vsel %vm282, %v275, 0
        %289 = vmatpush.bf16.msra.mxu0 0
        %290 = vmatpush.bf16.msra.mxu0 0
        %291 = vmatpush.bf16.msra.mxu0 0
        %292 = vmatpush.bf16.msra.mxu0 0
        %293 = vmatpush.bf16.msra.mxu0 0
        %294 = vmatpush.bf16.msra.mxu0 0
        %295 = vmatpush.bf16.msra.mxu0 0
        %296 = vmatpush.bf16.msra.mxu0 %v280
        %297 = vmatmul.bf16.gmra.mxu0 %v284
        %v298 = vpop.f32.mrf.mxu0
        %v299 = vadd.f32 0.0, %v298
        %v300 = vpop.f32.mrf.mxu0
        %v301 = vadd.f32 0.0, %v300
        %302 = vmatmul.bf16.gmra.mxu0 %v287
        %v303 = vpop.f32.mrf.mxu0
        %v304 = vadd.f32 0.0, %v303
        %v305 = vpop.f32.mrf.mxu0
        %v306 = vadd.f32 0.0, %v305
        %307 = vdwg.mxu0
        %v308 = vadd.f32 %v262, %v299
        %v309 = vadd.f32 %v263, %v301
        %v310 = vadd.f32 %v264, %v304
        %v311 = vadd.f32 %v265, %v306
        %vm312 = vcmask 523264
        %313 = vst.msk [vmem:[#allocation2] sm:$0xff] %vm312, %v308
        %314 = vst.msk [vmem:[#allocation2 + $0x8] sm:$0xff] %vm312, %v309
        %315 = vst.msk [vmem:[#allocation2 + $0x10] sm:$0xff] %vm312, %v310
        %316 = vst.msk [vmem:[#allocation2 + $0x18] sm:$0xff] %vm312, %v311
        %p317 = scmp.eq.s32.totalorder %s22, 3
        // Predicated region
        $region78: #{_lambda_.4} parent=68 // pred_check
          %p318 = pneg %p317
        $region79: #{_lambda_.4} parent=68 // pred_check_branch
          %320 = sbr.rel (%p318) target = $region81
        $region80: #{_lambda_.4} parent=68 // pred_region
          %v321 = vld [vmem:[#allocation2] sm:$0xff]
          %v322 = vld [vmem:[#allocation2 + $0x8] sm:$0xff]
          %v323 = vld [vmem:[#allocation2 + $0x10] sm:$0xff]
          %v324 = vld [vmem:[#allocation2 + $0x18] sm:$0xff]
          %v325 = vld [vmem:[%s2] sm:$0x1]
          %v327 = vperm.slane %v325, 0
          %v329 = vadd.f32 %v321, %v327
          %v330 = vadd.f32 %v322, %v327
          %v331 = vadd.f32 %v323, %v327
          %v332 = vadd.f32 %v324, %v327
          %v333 = vmax.f32 %v329, 0.0
          %v334 = vmax.f32 %v330, 0.0
          %v335 = vmax.f32 %v331, 0.0
          %v336 = vmax.f32 %v332, 0.0
          %v337 = vpack.c.bf16 %v333, %v333
          %v338 = vpack.c.bf16 %v334, %v334
          %v339 = vpack.c.bf16 %v335, %v335
          %v340 = vpack.c.bf16 %v336, %v336
          %vm341 = vcmask 519168
          %342 = vst.msk [vmem:[%s240] sm:$0xf] %vm341, %v337
          %343 = vst.msk [vmem:[%s240 + $0x4] sm:$0xf] %vm341, %v338
          %344 = vst.msk [vmem:[%s240 + $0x8] sm:$0xf] %vm341, %v339
          %345 = vst.msk [vmem:[%s240 + $0xc] sm:$0xf] %vm341, %v340
        $region81: #{_lambda_.4} parent=68 // pred_fallthru
          _
        %s346 = sand.u32 %s107, 1
        %s347 = scalar_lea.sflag [#allocation5], %s346
        %s348 = sand.u32 %s107, 1
        %s349 = smul.addr %s348, 16
        %s350 = scalar_lea.vmem [#allocation4], %s349
        // Predicated region
        $region82: #{_lambda_.4} parent=68 // pred_check
          %p351 = pneg %p117
        $region83: #{_lambda_.4} parent=68 // pred_check_branch
          %353 = sbr.rel (%p351) target = $region85
        $region84: #{_lambda_.4} parent=68 // pred_region
          %s354 = smul.u32 4, %s21
          %356 = vsyncadd %s347, 0
          %s357 = smul.addr %s354, 4
          %s358 = scalar_lea.hbm %s3, %s357
          %s359 = sshll.u32 %s350, 4
          %s360 = int_to_ptr.vmem [resolvable:$true] %s359
          %s361 = sshll.u32 %s358, 4
          %s362 = int_to_ptr.hbm [resolvable:$true] %s361
          %367 = dma.vmem_to_hbm [thread:$0]  %s360, 256, %s362, %s347, 64, 64, 4
        $region85: #{_lambda_.4} parent=68 // pred_fallthru
          _
      $region69: #{_lambda_.4} parent=5 // pred_fallthru
        _
      %p368 = scmp.le.s32.totalorder 2, %s12
      // Predicated region
      $region86: #{_lambda_.4} parent=5 // pred_check
        %p369 = pneg %p368
      $region87: #{_lambda_.4} parent=5 // pred_check_branch
        %371 = sbr.rel (%p369) target = $region89
      $region88: #{_lambda_.4} parent=5 // pred_region
        %s372 = ssub.s32 %s12, 2
        // Predicated region
        $region90: #{_lambda_.4} parent=88 // pred_check
          %p373 = pneg %p123
        $region91: #{_lambda_.4} parent=88 // pred_check_branch
          %375 = sbr.rel (%p373) target = $region93
        $region92: #{_lambda_.4} parent=88 // pred_region
          %s376 = sand.u32 %s108, 1
          %s377 = scalar_lea.sflag [#allocation5], %s376
          %s378 = sand.u32 %s108, 1
          %s379 = smul.addr %s378, 16
          %s380 = scalar_lea.vmem [#allocation4], %s379
          %382 = dma.done %s377, 256
        $region93: #{_lambda_.4} parent=88 // pred_fallthru
          _
      $region89: #{_lambda_.4} parent=5 // pred_fallthru
        _
    $region6: #{_lambda_.4} parent=1 // loop_footer
      %s16 = sadd.s32 1, %s12
    $region7: #{_lambda_.4} parent=1 // loop_footer_branch
      %11 = sbr.rel target = $region3
    $region8: #{_lambda_.4} parent=1 // loop_exit
      _
    %383 = vsyncpa [#allocation5], 1
    %s384 = scalar_lea.sflag [#allocation5], 1
    %385 = vsyncpa %s384, 1

// kernel: _lambda_.5
$region0: #{_lambda_.5}
  #allocation0 [shape = 'u32[]', space=smem, size = 0x4, offset = 0x4, fixed_abs, tag = 'smem constant byte address 0x4 - core index']
  #allocation1 [shape = 'u32[72,128]{1,0:T(1,128)}', space=vmem, size = 0x9000, scoped, tag = 'internal scratch']
  #allocation2 [shape = 'f32[8,128]{1,0:T(8,128)}', space=vmem, size = 0x1000, scoped, tag = 'scratch operand']
  %s0 = inlined_call_operand.vmem [shape: bf16[8,8,4,32], index: 0, kind: input, shape index: {}]
  %s1 = inlined_call_operand.vmem [shape: bf16[8,32,128], index: 1, kind: input, shape index: {}]
  %s2 = inlined_call_operand.vmem [shape: f32[1,128], index: 2, kind: input, shape index: {}]
  %s3 = inlined_call_operand.hbm [shape: bf16[32,128], index: 3, kind: output, shape index: {}]
  %s4 = sld [smem:[#allocation0]]
  $region87: #{_lambda_.5} parent=0
    _
  %s6 = ssub.s32 1, %s4
  %s7 = scalar_select 0, %s6, %s4
  $region1: #{_lambda_.5} parent=0
    #allocation3 [shape = 'u8[4096]{0}', space=vmem, size = 0x1000, scoped, tag = 'input window, operand 0']
    #allocation4 [shape = 'u8[4096]{0}', space=vmem, size = 0x1000, scoped, tag = 'output window, operand 0']
    #allocation5 [shape = 's32[2]{0}', space=sflag, size = 0x8, scoped, tag = 'scoped memory for _lambda_.5']
    %8 = vsyncpa [#allocation5], 0
    %s9 = scalar_lea.sflag [#allocation5], 1
    %10 = vsyncpa %s9, 0
    loop: start=0, step=1, limit=34
    $region2: #{_lambda_.5} parent=1 // loop_pre_header
      _
    $region3: #{_lambda_.5} parent=1 // loop_header
      %s12 = sphi 0, %s16
      %p13 = scmp.ge.s32.totalorder %s12, 34
      %s19 = sphi 0, %s31
      %s20 = sphi 0, %s27
      %s21 = sphi 0, %s19
      %s22 = sphi 0, %s20
      %s23 = sphi 0, %s21
      %s24 = sphi 0, %s22
      %s36 = sphi 0, %s38
      %s39 = sphi 0, %s36
      %s40 = sphi 0, %s39
      %s56 = sphi 0, %s40
      %s60 = sphi 0, %s60
      %s62 = sphi 0, %s60
      %s63 = sphi 0, %s62
      %s77 = sphi 0, %s63
      %s81 = sphi 0, %s81
      %s83 = sphi 0, %s81
      %s84 = sphi 0, %s83
      %s98 = sphi 0, %s84
      %s104 = sphi 0, %s106
      %s107 = sphi 0, %s104
      %s108 = sphi 0, %s107
      %s124 = sphi 0, %s108
    $region4: #{_lambda_.5} parent=1 // loop_header_branch
      %15 = sbr.rel (%p13) target = $region8
    $region5: #{_lambda_.5} parent=1 // loop_body
      %s17 = ssub.s32 %s12, 1
      %s18 = ssub.s32 %s12, 2
      %s25 = sadd.s32 1, %s20
      %p26 = scmp.ge.s32.totalorder %s25, 8
      %s27 = scalar_select %p26, 0, %s25
      %s28 = sadd.s32 1, %s19
      %s29 = scalar_select %p26, %s28, %s19
      %p30 = scmp.ge.s32.totalorder %s29, 4
      %s31 = scalar_select %p30, 0, %s29
      %s32 = ssub.s32 %s19, %s31
      %s33 = ssub.s32 %s20, %s27
      %s34 = sor.u32 %s32, %s33
      %p35 = scmp.eq.s32.totalorder %s34, 0
      %s37 = sadd.s32 %s36, 1
      %s38 = scalar_select %p35, %s36, %s37
      %p41 = pneg %p35
      %p42 = scmp.eq.s32.totalorder %s12, 31
      %p43 = por %p41, %p42
      %p44 = scmp.ne.s32.totalorder %s36, %s39
      %p45 = scmp.eq.s32.totalorder %s12, 0
      %p46 = por %p44, %p45
      %p47 = scmp.ne.s32.totalorder %s36, %s39
      %p48 = scmp.eq.s32.totalorder %s17, 31
      %p49 = por %p47, %p48
      %p50 = scmp.ne.s32.totalorder %s39, %s40
      %p51 = scmp.eq.s32.totalorder %s17, 0
      %p52 = por %p50, %p51
      %p53 = scmp.ne.s32.totalorder %s39, %s40
      %p54 = scmp.eq.s32.totalorder %s18, 31
      %p55 = por %p53, %p54
      %p57 = scmp.ne.s32.totalorder %s40, %s56
      %p58 = scmp.eq.s32.totalorder %s18, 0
      %p59 = por %p57, %p58
      %s61 = sadd.s32 %s60, 1
      %p64 = scmp.eq.s32.totalorder %s12, 31
      %p65 = scmp.ne.s32.totalorder %s60, %s62
      %p66 = scmp.eq.s32.totalorder %s12, 0
      %p67 = por %p65, %p66
      %p68 = scmp.ne.s32.totalorder %s60, %s62
      %p69 = scmp.eq.s32.totalorder %s17, 31
      %p70 = por %p68, %p69
      %p71 = scmp.ne.s32.totalorder %s62, %s63
      %p72 = scmp.eq.s32.totalorder %s17, 0
      %p73 = por %p71, %p72
      %p74 = scmp.ne.s32.totalorder %s62, %s63
      %p75 = scmp.eq.s32.totalorder %s18, 31
      %p76 = por %p74, %p75
      %p78 = scmp.ne.s32.totalorder %s63, %s77
      %p79 = scmp.eq.s32.totalorder %s18, 0
      %p80 = por %p78, %p79
      %s82 = sadd.s32 %s81, 1
      %p85 = scmp.eq.s32.totalorder %s12, 31
      %p86 = scmp.ne.s32.totalorder %s81, %s83
      %p87 = scmp.eq.s32.totalorder %s12, 0
      %p88 = por %p86, %p87
      %p89 = scmp.ne.s32.totalorder %s81, %s83
      %p90 = scmp.eq.s32.totalorder %s17, 31
      %p91 = por %p89, %p90
      %p92 = scmp.ne.s32.totalorder %s83, %s84
      %p93 = scmp.eq.s32.totalorder %s17, 0
      %p94 = por %p92, %p93
      %p95 = scmp.ne.s32.totalorder %s83, %s84
      %p96 = scmp.eq.s32.totalorder %s18, 31
      %p97 = por %p95, %p96
      %p99 = scmp.ne.s32.totalorder %s84, %s98
      %p100 = scmp.eq.s32.totalorder %s18, 0
      %p101 = por %p99, %p100
      %s102 = ssub.s32 %s19, %s31
      %p103 = scmp.eq.s32.totalorder %s102, 0
      %s105 = sadd.s32 %s104, 1
      %s106 = scalar_select %p103, %s104, %s105
      %p109 = pneg %p103
      %p110 = scmp.eq.s32.totalorder %s12, 31
      %p111 = por %p109, %p110
      %p112 = scmp.ne.s32.totalorder %s104, %s107
      %p113 = scmp.eq.s32.totalorder %s12, 0
      %p114 = por %p112, %p113
      %p115 = scmp.ne.s32.totalorder %s104, %s107
      %p116 = scmp.eq.s32.totalorder %s17, 31
      %p117 = por %p115, %p116
      %p118 = scmp.ne.s32.totalorder %s107, %s108
      %p119 = scmp.eq.s32.totalorder %s17, 0
      %p120 = por %p118, %p119
      %p121 = scmp.ne.s32.totalorder %s107, %s108
      %p122 = scmp.eq.s32.totalorder %s18, 31
      %p123 = por %p121, %p122
      %p125 = scmp.ne.s32.totalorder %s108, %s124
      %p126 = scmp.eq.s32.totalorder %s18, 0
      %p127 = por %p125, %p126
      %p128 = scmp.le.s32.totalorder 1, %s12
      %p129 = scmp.lt.s32.totalorder %s12, 33
      %p130 = pnand %p128, %p129
      %p131 = pneg %p130
      // Predicated region
      $region9: #{_lambda_.5} parent=5 // pred_check
        _
      $region10: #{_lambda_.5} parent=5 // pred_check_branch
        %133 = sbr.rel (%p130) target = $region12
      $region11: #{_lambda_.5} parent=5 // pred_region
        %s134 = ssub.s32 %s12, 1
        // Predicated region
        $region13: #{_lambda_.5} parent=11 // pred_check
          %p135 = pneg %p73
        $region14: #{_lambda_.5} parent=11 // pred_check_branch
          %137 = sbr.rel (%p135) target = $region16
        $region15: #{_lambda_.5} parent=11 // pred_region
          _
        $region16: #{_lambda_.5} parent=11 // pred_fallthru
          _
        // Predicated region
        $region17: #{_lambda_.5} parent=11 // pred_check
          %p138 = pneg %p94
        $region18: #{_lambda_.5} parent=11 // pred_check_branch
          %140 = sbr.rel (%p138) target = $region20
        $region19: #{_lambda_.5} parent=11 // pred_region
          _
        $region20: #{_lambda_.5} parent=11 // pred_fallthru
          _
      $region12: #{_lambda_.5} parent=5 // pred_fallthru
        _
      %p141 = scmp.lt.s32.totalorder %s12, 32
      // Predicated region
      $region21: #{_lambda_.5} parent=5 // pred_check
        %p142 = pneg %p141
      $region22: #{_lambda_.5} parent=5 // pred_check_branch
        %144 = sbr.rel (%p142) target = $region24
      $region23: #{_lambda_.5} parent=5 // pred_region
        // Predicated region
        $region25: #{_lambda_.5} parent=23 // pred_check
          %p145 = pneg %p46
        $region26: #{_lambda_.5} parent=23 // pred_check_branch
          %147 = sbr.rel (%p145) target = $region28
        $region27: #{_lambda_.5} parent=23 // pred_region
          %s148 = sand.u32 %s36, 1
          %s149 = sand.u32 %s36, 1
          %s150 = smul.addr %s149, 4
          %s151 = scalar_lea.vmem [#allocation3], %s150
          %s152 = smul.u32 2, %s19
          %s153 = smul.addr %s152, 8
          %s154 = sadd.s32 %s20, %s153
          %s155 = smul.addr %s154, 2
          %s156 = scalar_lea.vmem %s0, %s155
          // Predicated region
          $region29: #{_lambda_.5} parent=27 // pred_check
            _
          $region30: #{_lambda_.5} parent=27 // pred_check_branch
            %158 = sbr.rel (0) target = $region32
          $region31: #{_lambda_.5} parent=27 // pred_region
            // Predicated region
            $region33: #{_lambda_.5} parent=31 // pred_check
              _
            $region34: #{_lambda_.5} parent=31 // pred_check_branch
              %160 = sbr.rel target = $region36
            $region35: #{_lambda_.5} parent=31 // pred_region
              // Predicated region
              $region48: #{_lambda_.5} parent=35 // pred_check
                _
              $region49: #{_lambda_.5} parent=35 // pred_check_branch
                %178 = sbr.rel (0) target = $region51
              $region50: #{_lambda_.5} parent=35 // pred_region
                %s180 = ssub.s32 4, 1
                loop: start=0, step=1, limit=1
                $region52: #{_lambda_.5} parent=50 // loop_pre_header
                  _
                $region53: #{_lambda_.5} parent=50 // loop_header
                  %s182 = sphi 0, %s186
                  %p183 = scmp.ge.s32.totalorder %s182, 1
                  %s187 = sphi %s156, %s156
                  %s188 = sphi %s151, %s151
                $region54: #{_lambda_.5} parent=50 // loop_header_branch
                  %185 = sbr.rel (%p183) target = $region58
                $region55: #{_lambda_.5} parent=50 // loop_body
                  %v189 = vld [vmem:[%s187] sm:%s180]
                  %190 = vst [vmem:[%s188] sm:%s180] %v189
                  %v191 = vld [vmem:[%s187 + $0x10] sm:%s180]
                  %192 = vst [vmem:[%s188 + $0x2] sm:%s180] %v191
                $region56: #{_lambda_.5} parent=50 // loop_footer
                  %s186 = sadd.s32 1, %s182
                $region57: #{_lambda_.5} parent=50 // loop_footer_branch
                  %181 = sbr.rel target = $region53
                $region58: #{_lambda_.5} parent=50 // loop_exit
                  _
              $region51: #{_lambda_.5} parent=35 // pred_fallthru
                _
            $region36: #{_lambda_.5} parent=31 // pred_fallthru
              _
            // Predicated region
            $region37: #{_lambda_.5} parent=31 // pred_check
              _
            $region38: #{_lambda_.5} parent=31 // pred_check_branch
              %162 = sbr.rel (0) target = $region40
            $region39: #{_lambda_.5} parent=31 // pred_region
              %s164 = ssub.s32 4, 1
              loop: start=0, step=1, limit=1
              $region41: #{_lambda_.5} parent=39 // loop_pre_header
                _
              $region42: #{_lambda_.5} parent=39 // loop_header
                %s166 = sphi 0, %s170
                %p167 = scmp.ge.s32.totalorder %s166, 1
                %s171 = sphi %s156, %s156
                %s172 = sphi %s151, %s151
              $region43: #{_lambda_.5} parent=39 // loop_header_branch
                %169 = sbr.rel (%p167) target = $region47
              $region44: #{_lambda_.5} parent=39 // loop_body
                %v173 = vld [vmem:[%s171] sm:%s164]
                %174 = vst [vmem:[%s172] sm:%s164] %v173
                %v175 = vld [vmem:[%s171 + $0x10] sm:%s164]
                %176 = vst [vmem:[%s172 + $0x2] sm:%s164] %v175
              $region45: #{_lambda_.5} parent=39 // loop_footer
                %s170 = sadd.s32 1, %s166
              $region46: #{_lambda_.5} parent=39 // loop_footer_branch
                %165 = sbr.rel target = $region42
              $region47: #{_lambda_.5} parent=39 // loop_exit
                _
            $region40: #{_lambda_.5} parent=31 // pred_fallthru
              _
          $region32: #{_lambda_.5} parent=27 // pred_fallthru
            _
          %193 = vnop
        $region28: #{_lambda_.5} parent=23 // pred_fallthru
          _
      $region24: #{_lambda_.5} parent=5 // pred_fallthru
        _
      %p194 = scmp.le.s32.totalorder 1, %s12
      %p195 = scmp.lt.s32.totalorder %s12, 33
      %p196 = pnand %p194, %p195
      %p197 = pneg %p196
      // Predicated region
      $region59: #{_lambda_.5} parent=5 // pred_check
        _
      $region60: #{_lambda_.5} parent=5 // pred_check_branch
        %199 = sbr.rel (%p196) target = $region62
      $region61: #{_lambda_.5} parent=5 // pred_region
        %s200 = ssub.s32 %s12, 1
        %s201 = sand.u32 %s39, 1
        %s202 = sand.u32 %s39, 1
        %s203 = smul.addr %s202, 4
        %s204 = scalar_lea.vmem [#allocation3], %s203
        // Predicated region
        $region63: #{_lambda_.5} parent=61 // pred_check
          %p205 = pneg %p52
        $region64: #{_lambda_.5} parent=61 // pred_check_branch
          %207 = sbr.rel (%p205) target = $region66
        $region65: #{_lambda_.5} parent=61 // pred_region
          _
        $region66: #{_lambda_.5} parent=61 // pred_fallthru
          _
        %s208 = sand.u32 %s39, 1
        %s209 = sand.u32 %s39, 1
        %s210 = smul.addr %s209, 4
        %s211 = scalar_lea.vmem [#allocation3], %s210
        %p212 = pneg %p52
        %p213 = pneg %p49
        %p214 = pneg %p73
        %p215 = pneg %p70
        %p216 = pneg %p94
        %p217 = pneg %p91
        %p218 = pneg %p120
        %p219 = pneg %p117
        %s220 = sand.u32 %s107, 1
        %s221 = scalar_lea.sflag [#allocation5], %s220
        %s222 = sand.u32 %s107, 1
        %s223 = smul.addr %s222, 4
        %s224 = scalar_lea.vmem [#allocation4], %s223
        %s225 = smul.u32 2, %s21
        %p227 = scmp.eq.s32.totalorder %s22, 0
        // Predicated region
        $region67: #{_lambda_.5} parent=61 // pred_check
          %p228 = pneg %p227
        $region68: #{_lambda_.5} parent=61 // pred_check_branch
          %230 = sbr.rel (%p228) target = $region70
        $region69: #{_lambda_.5} parent=61 // pred_region
          %231 = vst [vmem:[#allocation2] sm:$0xff] 0.0
        $region70: #{_lambda_.5} parent=61 // pred_fallthru
          _
        %s232 = smul.u32 %s22, 4
        %s233 = smul.addr %s232, 4
        %s234 = scalar_lea.vmem %s1, %s233
        %v235 = vld [vmem:[%s234] sm:$0xf]
        %v236 = vld [vmem:[%s234 + $0x4] sm:$0xf]
        %v237 = vld [vmem:[%s234 + $0x8] sm:$0xf]
        %v238 = vld [vmem:[%s234 + $0xc] sm:$0xf]
        %v239 = vld [vmem:[#allocation2] sm:$0xf]
        %v240 = vld [vmem:[%s204] sm:$0x3]
        %v245 = vunpack.c.l.b16 %v235
        %v246 = vunpack.c.l.b16 %v236
        %v247 = vunpack.c.l.b16 %v237
        %v248 = vunpack.c.l.b16 %v238
        %v249 = vpack.c.b16 %v246, %v245
        %v250 = vpack.c.b16 %v248, %v247
        %vm253 = vcmask 261120
        %v255 = vsel %vm253, %v240, 0
        %257 = vmatpush.bf16.msra.mxu0 0
        %258 = vmatpush.bf16.msra.mxu0 0
        %259 = vmatpush.bf16.msra.mxu0 0
        %260 = vmatpush.bf16.msra.mxu0 0
        %261 = vmatpush.bf16.msra.mxu0 0
        %262 = vmatpush.bf16.msra.mxu0 0
        %263 = vmatpush.bf16.msra.mxu0 %v250
        %264 = vmatpush.bf16.msra.mxu0 %v249
        %265 = vmatmul.bf16.gmra.mxu0 %v255
        %v266 = vpop.f32.mrf.mxu0
        %v267 = vadd.f32 0.0, %v266
        %v268 = vpop.f32.mrf.mxu0
        %269 = vdwg.mxu0
        %v270 = vadd.f32 %v239, %v267
        %271 = vst [vmem:[#allocation2] sm:$0xf] %v270
        %v272 = vld [vmem:[#allocation2 + $0x4] sm:$0xf]
        %s273 = scalar_lea.vmem %s204, 2 [#allocation3]
        %v274 = vld [vmem:[%s273] sm:$0x3]
        %v276 = vsel %vm253, %v274, 0
        %278 = vmatpush.bf16.msra.mxu0 0
        %279 = vmatpush.bf16.msra.mxu0 0
        %280 = vmatpush.bf16.msra.mxu0 0
        %281 = vmatpush.bf16.msra.mxu0 0
        %282 = vmatpush.bf16.msra.mxu0 0
        %283 = vmatpush.bf16.msra.mxu0 0
        %284 = vmatpush.bf16.msra.mxu0 %v250
        %285 = vmatpush.bf16.msra.mxu0 %v249
        %286 = vmatmul.bf16.gmra.mxu0 %v276
        %v287 = vpop.f32.mrf.mxu0
        %v288 = vadd.f32 0.0, %v287
        %v289 = vpop.f32.mrf.mxu0
        %290 = vdwg.mxu0
        %v291 = vadd.f32 %v272, %v288
        %292 = vst [vmem:[#allocation2 + $0x4] sm:$0xf] %v291
        %p293 = scmp.eq.s32.totalorder %s22, 7
        // Predicated region
        $region71: #{_lambda_.5} parent=61 // pred_check
          %p294 = pneg %p293
        $region72: #{_lambda_.5} parent=61 // pred_check_branch
          %296 = sbr.rel (%p294) target = $region74
        $region73: #{_lambda_.5} parent=61 // pred_region
          %v297 = vld [vmem:[#allocation2] sm:$0xff]
          %v298 = vld [vmem:[%s2] sm:$0x1]
          %v300 = vperm.slane %v298, 0
          %v302 = vadd.f32 %v297, %v300
          %v303 = vmax.f32 %v302, 0.0
          %v304 = vpack.c.bf16 %v303, %v303
          %305 = vst [vmem:[%s224] sm:$0xf] %v304
        $region74: #{_lambda_.5} parent=61 // pred_fallthru
          _
        %s306 = sand.u32 %s107, 1
        %s307 = scalar_lea.sflag [#allocation5], %s306
        %s308 = sand.u32 %s107, 1
        %s309 = smul.addr %s308, 4
        %s310 = scalar_lea.vmem [#allocation4], %s309
        // Predicated region
        $region75: #{_lambda_.5} parent=61 // pred_check
          %p311 = pneg %p117
        $region76: #{_lambda_.5} parent=61 // pred_check_branch
          %313 = sbr.rel (%p311) target = $region78
        $region77: #{_lambda_.5} parent=61 // pred_region
          %315 = vsyncadd %s307, 0
          %s316 = smul.addr %s21, 4
          %s317 = scalar_lea.hbm %s3, %s316
          %s319 = sshll.u32 %s310, 4
          %s320 = int_to_ptr.vmem [resolvable:$true] %s319
          %s321 = sshll.u32 %s317, 4
          %s322 = int_to_ptr.hbm [resolvable:$true] %s321
          %324 = dma.vmem_to_hbm [thread:$0]  %s320, 64, %s322, %s307
        $region78: #{_lambda_.5} parent=61 // pred_fallthru
          _
      $region62: #{_lambda_.5} parent=5 // pred_fallthru
        _
      %p325 = scmp.le.s32.totalorder 2, %s12
      // Predicated region
      $region79: #{_lambda_.5} parent=5 // pred_check
        %p326 = pneg %p325
      $region80: #{_lambda_.5} parent=5 // pred_check_branch
        %328 = sbr.rel (%p326) target = $region82
      $region81: #{_lambda_.5} parent=5 // pred_region
        %s329 = ssub.s32 %s12, 2
        // Predicated region
        $region83: #{_lambda_.5} parent=81 // pred_check
          %p330 = pneg %p123
        $region84: #{_lambda_.5} parent=81 // pred_check_branch
          %332 = sbr.rel (%p330) target = $region86
        $region85: #{_lambda_.5} parent=81 // pred_region
          %s333 = sand.u32 %s108, 1
          %s334 = scalar_lea.sflag [#allocation5], %s333
          %s335 = sand.u32 %s108, 1
          %s336 = smul.addr %s335, 4
          %s337 = scalar_lea.vmem [#allocation4], %s336
          %339 = dma.done %s334, 64
        $region86: #{_lambda_.5} parent=81 // pred_fallthru
          _
      $region82: #{_lambda_.5} parent=5 // pred_fallthru
        _
    $region6: #{_lambda_.5} parent=1 // loop_footer
      %s16 = sadd.s32 1, %s12
    $region7: #{_lambda_.5} parent=1 // loop_footer_branch
      %11 = sbr.rel target = $region3
    $region8: #{_lambda_.5} parent=1 // loop_exit
      _
    %340 = vsyncpa [#allocation5], 1
    %s341 = scalar_lea.sflag [#allocation5], 1
    %342 = vsyncpa %s341, 1

// kernel: _lambda_.3
$region0: #{_lambda_.3}
  #allocation0 [shape = 'u32[]', space=smem, size = 0x4, offset = 0x4, fixed_abs, tag = 'smem constant byte address 0x4 - core index']
  #allocation1 [shape = 'u32[72,128]{1,0:T(1,128)}', space=vmem, size = 0x9000, scoped, tag = 'internal scratch']
  #allocation2 [shape = 'f32[128,32]{1,0:T(8,128)}', space=vmem, size = 0x10000, scoped, tag = 'scratch operand']
  %s0 = inlined_call_operand.vmem [shape: bf16[32,2,16,8], index: 0, kind: input, shape index: {}]
  %s1 = inlined_call_operand.vmem [shape: bf16[2,8,32], index: 1, kind: input, shape index: {}]
  %s2 = inlined_call_operand.vmem [shape: f32[1,32], index: 2, kind: input, shape index: {}]
  %s3 = inlined_call_operand.hbm [shape: bf16[512,32], index: 3, kind: output, shape index: {}]
  %s4 = sld [smem:[#allocation0]]
  $region94: #{_lambda_.3} parent=0
    _
  %s6 = ssub.s32 1, %s4
  %s7 = scalar_select 0, %s6, %s4
  $region1: #{_lambda_.3} parent=0
    #allocation3 [shape = 'u8[65536]{0}', space=vmem, size = 0x10000, scoped, tag = 'input window, operand 0']
    #allocation4 [shape = 'u8[65536]{0}', space=vmem, size = 0x10000, scoped, tag = 'output window, operand 0']
    #allocation5 [shape = 's32[2]{0}', space=sflag, size = 0x8, scoped, tag = 'scoped memory for _lambda_.3']
    %8 = vsyncpa [#allocation5], 0
    %s9 = scalar_lea.sflag [#allocation5], 1
    %10 = vsyncpa %s9, 0
    loop: start=0, step=1, limit=10
    $region2: #{_lambda_.3} parent=1 // loop_pre_header
      _
    $region3: #{_lambda_.3} parent=1 // loop_header
      %s12 = sphi 0, %s16
      %p13 = scmp.ge.s32.totalorder %s12, 10
      %s19 = sphi 0, %s31
      %s20 = sphi 0, %s27
      %s21 = sphi 0, %s19
      %s22 = sphi 0, %s20
      %s23 = sphi 0, %s21
      %s24 = sphi 0, %s22
      %s36 = sphi 0, %s38
      %s39 = sphi 0, %s36
      %s40 = sphi 0, %s39
      %s56 = sphi 0, %s40
      %s60 = sphi 0, %s60
      %s62 = sphi 0, %s60
      %s63 = sphi 0, %s62
      %s77 = sphi 0, %s63
      %s81 = sphi 0, %s81
      %s83 = sphi 0, %s81
      %s84 = sphi 0, %s83
      %s98 = sphi 0, %s84
      %s104 = sphi 0, %s106
      %s107 = sphi 0, %s104
      %s108 = sphi 0, %s107
      %s124 = sphi 0, %s108
    $region4: #{_lambda_.3} parent=1 // loop_header_branch
      %15 = sbr.rel (%p13) target = $region8
    $region5: #{_lambda_.3} parent=1 // loop_body
      %s17 = ssub.s32 %s12, 1
      %s18 = ssub.s32 %s12, 2
      %s25 = sadd.s32 1, %s20
      %p26 = scmp.ge.s32.totalorder %s25, 2
      %s27 = scalar_select %p26, 0, %s25
      %s28 = sadd.s32 1, %s19
      %s29 = scalar_select %p26, %s28, %s19
      %p30 = scmp.ge.s32.totalorder %s29, 4
      %s31 = scalar_select %p30, 0, %s29
      %s32 = ssub.s32 %s19, %s31
      %s33 = ssub.s32 %s20, %s27
      %s34 = sor.u32 %s32, %s33
      %p35 = scmp.eq.s32.totalorder %s34, 0
      %s37 = sadd.s32 %s36, 1
      %s38 = scalar_select %p35, %s36, %s37
      %p41 = pneg %p35
      %p42 = scmp.eq.s32.totalorder %s12, 7
      %p43 = por %p41, %p42
      %p44 = scmp.ne.s32.totalorder %s36, %s39
      %p45 = scmp.eq.s32.totalorder %s12, 0
      %p46 = por %p44, %p45
      %p47 = scmp.ne.s32.totalorder %s36, %s39
      %p48 = scmp.eq.s32.totalorder %s17, 7
      %p49 = por %p47, %p48
      %p50 = scmp.ne.s32.totalorder %s39, %s40
      %p51 = scmp.eq.s32.totalorder %s17, 0
      %p52 = por %p50, %p51
      %p53 = scmp.ne.s32.totalorder %s39, %s40
      %p54 = scmp.eq.s32.totalorder %s18, 7
      %p55 = por %p53, %p54
      %p57 = scmp.ne.s32.totalorder %s40, %s56
      %p58 = scmp.eq.s32.totalorder %s18, 0
      %p59 = por %p57, %p58
      %s61 = sadd.s32 %s60, 1
      %p64 = scmp.eq.s32.totalorder %s12, 7
      %p65 = scmp.ne.s32.totalorder %s60, %s62
      %p66 = scmp.eq.s32.totalorder %s12, 0
      %p67 = por %p65, %p66
      %p68 = scmp.ne.s32.totalorder %s60, %s62
      %p69 = scmp.eq.s32.totalorder %s17, 7
      %p70 = por %p68, %p69
      %p71 = scmp.ne.s32.totalorder %s62, %s63
      %p72 = scmp.eq.s32.totalorder %s17, 0
      %p73 = por %p71, %p72
      %p74 = scmp.ne.s32.totalorder %s62, %s63
      %p75 = scmp.eq.s32.totalorder %s18, 7
      %p76 = por %p74, %p75
      %p78 = scmp.ne.s32.totalorder %s63, %s77
      %p79 = scmp.eq.s32.totalorder %s18, 0
      %p80 = por %p78, %p79
      %s82 = sadd.s32 %s81, 1
      %p85 = scmp.eq.s32.totalorder %s12, 7
      %p86 = scmp.ne.s32.totalorder %s81, %s83
      %p87 = scmp.eq.s32.totalorder %s12, 0
      %p88 = por %p86, %p87
      %p89 = scmp.ne.s32.totalorder %s81, %s83
      %p90 = scmp.eq.s32.totalorder %s17, 7
      %p91 = por %p89, %p90
      %p92 = scmp.ne.s32.totalorder %s83, %s84
      %p93 = scmp.eq.s32.totalorder %s17, 0
      %p94 = por %p92, %p93
      %p95 = scmp.ne.s32.totalorder %s83, %s84
      %p96 = scmp.eq.s32.totalorder %s18, 7
      %p97 = por %p95, %p96
      %p99 = scmp.ne.s32.totalorder %s84, %s98
      %p100 = scmp.eq.s32.totalorder %s18, 0
      %p101 = por %p99, %p100
      %s102 = ssub.s32 %s19, %s31
      %p103 = scmp.eq.s32.totalorder %s102, 0
      %s105 = sadd.s32 %s104, 1
      %s106 = scalar_select %p103, %s104, %s105
      %p109 = pneg %p103
      %p110 = scmp.eq.s32.totalorder %s12, 7
      %p111 = por %p109, %p110
      %p112 = scmp.ne.s32.totalorder %s104, %s107
      %p113 = scmp.eq.s32.totalorder %s12, 0
      %p114 = por %p112, %p113
      %p115 = scmp.ne.s32.totalorder %s104, %s107
      %p116 = scmp.eq.s32.totalorder %s17, 7
      %p117 = por %p115, %p116
      %p118 = scmp.ne.s32.totalorder %s107, %s108
      %p119 = scmp.eq.s32.totalorder %s17, 0
      %p120 = por %p118, %p119
      %p121 = scmp.ne.s32.totalorder %s107, %s108
      %p122 = scmp.eq.s32.totalorder %s18, 7
      %p123 = por %p121, %p122
      %p125 = scmp.ne.s32.totalorder %s108, %s124
      %p126 = scmp.eq.s32.totalorder %s18, 0
      %p127 = por %p125, %p126
      %p128 = scmp.le.s32.totalorder 1, %s12
      %p129 = scmp.lt.s32.totalorder %s12, 9
      %p130 = pnand %p128, %p129
      %p131 = pneg %p130
      // Predicated region
      $region9: #{_lambda_.3} parent=5 // pred_check
        _
      $region10: #{_lambda_.3} parent=5 // pred_check_branch
        %133 = sbr.rel (%p130) target = $region12
      $region11: #{_lambda_.3} parent=5 // pred_region
        %s134 = ssub.s32 %s12, 1
        // Predicated region
        $region13: #{_lambda_.3} parent=11 // pred_check
          %p135 = pneg %p73
        $region14: #{_lambda_.3} parent=11 // pred_check_branch
          %137 = sbr.rel (%p135) target = $region16
        $region15: #{_lambda_.3} parent=11 // pred_region
          _
        $region16: #{_lambda_.3} parent=11 // pred_fallthru
          _
        // Predicated region
        $region17: #{_lambda_.3} parent=11 // pred_check
          %p138 = pneg %p94
        $region18: #{_lambda_.3} parent=11 // pred_check_branch
          %140 = sbr.rel (%p138) target = $region20
        $region19: #{_lambda_.3} parent=11 // pred_region
          _
        $region20: #{_lambda_.3} parent=11 // pred_fallthru
          _
      $region12: #{_lambda_.3} parent=5 // pred_fallthru
        _
      %p141 = scmp.lt.s32.totalorder %s12, 8
      // Predicated region
      $region21: #{_lambda_.3} parent=5 // pred_check
        %p142 = pneg %p141
      $region22: #{_lambda_.3} parent=5 // pred_check_branch
        %144 = sbr.rel (%p142) target = $region24
      $region23: #{_lambda_.3} parent=5 // pred_region
        // Predicated region
        $region25: #{_lambda_.3} parent=23 // pred_check
          %p145 = pneg %p46
        $region26: #{_lambda_.3} parent=23 // pred_check_branch
          %147 = sbr.rel (%p145) target = $region28
        $region27: #{_lambda_.3} parent=23 // pred_region
          %s148 = sand.u32 %s36, 1
          %s149 = sand.u32 %s36, 1
          %s150 = smul.addr %s149, 64
          %s151 = scalar_lea.vmem [#allocation3], %s150
          %s152 = smul.u32 8, %s19
          %s153 = smul.addr %s20, 2
          %s154 = smul.addr %s152, 4
          %s155 = sadd.s32 %s153, %s154
          %s156 = smul.addr %s155, 4
          %s157 = scalar_lea.vmem %s0, %s156
          // Predicated region
          $region29: #{_lambda_.3} parent=27 // pred_check
            _
          $region30: #{_lambda_.3} parent=27 // pred_check_branch
            %159 = sbr.rel (0) target = $region32
          $region31: #{_lambda_.3} parent=27 // pred_region
            // Predicated region
            $region33: #{_lambda_.3} parent=31 // pred_check
              _
            $region34: #{_lambda_.3} parent=31 // pred_check_branch
              %161 = sbr.rel target = $region36
            $region35: #{_lambda_.3} parent=31 // pred_region
              // Predicated region
              $region48: #{_lambda_.3} parent=35 // pred_check
                _
              $region49: #{_lambda_.3} parent=35 // pred_check_branch
                %207 = sbr.rel (0) target = $region51
              $region50: #{_lambda_.3} parent=35 // pred_region
                loop: start=0, step=1, limit=1
                $region52: #{_lambda_.3} parent=50 // loop_pre_header
                  _
                $region53: #{_lambda_.3} parent=50 // loop_header
                  %s209 = sphi 0, %s213
                  %p210 = scmp.ge.s32.totalorder %s209, 1
                  %s214 = sphi %s157, %s157
                  %s215 = sphi %s151, %s151
                $region54: #{_lambda_.3} parent=50 // loop_header_branch
                  %212 = sbr.rel (%p210) target = $region58
                $region55: #{_lambda_.3} parent=50 // loop_body
                  _
                $region56: #{_lambda_.3} parent=50 // loop_footer
                  %s213 = sadd.s32 1, %s209
                $region57: #{_lambda_.3} parent=50 // loop_footer_branch
                  %208 = sbr.rel target = $region53
                $region58: #{_lambda_.3} parent=50 // loop_exit
                  _
                %s217 = ssub.s32 16, 1
                loop: start=0, step=1, limit=1
                $region59: #{_lambda_.3} parent=50 // loop_pre_header
                  _
                $region60: #{_lambda_.3} parent=50 // loop_header
                  %s219 = sphi 0, %s223
                  %p220 = scmp.ge.s32.totalorder %s219, 1
                  %s224 = sphi %s157, %s157
                  %s225 = sphi %s151, %s151
                $region61: #{_lambda_.3} parent=50 // loop_header_branch
                  %222 = sbr.rel (%p220) target = $region65
                $region62: #{_lambda_.3} parent=50 // loop_body
                  %v226 = vld [vmem:[%s224] sm:%s217]
                  %227 = vst [vmem:[%s225] sm:%s217] %v226
                  %v228 = vld [vmem:[%s224 + $0x4] sm:%s217]
                  %229 = vst [vmem:[%s225 + $0x4] sm:%s217] %v228
                  %v230 = vld [vmem:[%s224 + $0x10] sm:%s217]
                  %231 = vst [vmem:[%s225 + $0x8] sm:%s217] %v230
                  %v232 = vld [vmem:[%s224 + $0x14] sm:%s217]
                  %233 = vst [vmem:[%s225 + $0xc] sm:%s217] %v232
                  %v234 = vld [vmem:[%s224 + $0x20] sm:%s217]
                  %235 = vst [vmem:[%s225 + $0x10] sm:%s217] %v234
                  %v236 = vld [vmem:[%s224 + $0x24] sm:%s217]
                  %237 = vst [vmem:[%s225 + $0x14] sm:%s217] %v236
                  %v238 = vld [vmem:[%s224 + $0x30] sm:%s217]
                  %239 = vst [vmem:[%s225 + $0x18] sm:%s217] %v238
                  %v240 = vld [vmem:[%s224 + $0x34] sm:%s217]
                  %241 = vst [vmem:[%s225 + $0x1c] sm:%s217] %v240
                  %v242 = vld [vmem:[%s224 + $0x40] sm:%s217]
                  %243 = vst [vmem:[%s225 + $0x20] sm:%s217] %v242
                  %v244 = vld [vmem:[%s224 + $0x44] sm:%s217]
                  %245 = vst [vmem:[%s225 + $0x24] sm:%s217] %v244
                  %v246 = vld [vmem:[%s224 + $0x50] sm:%s217]
                  %247 = vst [vmem:[%s225 + $0x28] sm:%s217] %v246
                  %v248 = vld [vmem:[%s224 + $0x54] sm:%s217]
                  %249 = vst [vmem:[%s225 + $0x2c] sm:%s217] %v248
                  %v250 = vld [vmem:[%s224 + $0x60] sm:%s217]
                  %251 = vst [vmem:[%s225 + $0x30] sm:%s217] %v250
                  %v252 = vld [vmem:[%s224 + $0x64] sm:%s217]
                  %253 = vst [vmem:[%s225 + $0x34] sm:%s217] %v252
                  %v254 = vld [vmem:[%s224 + $0x70] sm:%s217]
                  %255 = vst [vmem:[%s225 + $0x38] sm:%s217] %v254
                  %v256 = vld [vmem:[%s224 + $0x74] sm:%s217]
                  %257 = vst [vmem:[%s225 + $0x3c] sm:%s217] %v256
                $region63: #{_lambda_.3} parent=50 // loop_footer
                  %s223 = sadd.s32 1, %s219
                $region64: #{_lambda_.3} parent=50 // loop_footer_branch
                  %218 = sbr.rel target = $region60
                $region65: #{_lambda_.3} parent=50 // loop_exit
                  _
              $region51: #{_lambda_.3} parent=35 // pred_fallthru
                _
            $region36: #{_lambda_.3} parent=31 // pred_fallthru
              _
            // Predicated region
            $region37: #{_lambda_.3} parent=31 // pred_check
              _
            $region38: #{_lambda_.3} parent=31 // pred_check_branch
              %163 = sbr.rel (0) target = $region40
            $region39: #{_lambda_.3} parent=31 // pred_region
              %s165 = ssub.s32 16, 1
              loop: start=0, step=1, limit=1
              $region41: #{_lambda_.3} parent=39 // loop_pre_header
                _
              $region42: #{_lambda_.3} parent=39 // loop_header
                %s167 = sphi 0, %s171
                %p168 = scmp.ge.s32.totalorder %s167, 1
                %s172 = sphi %s157, %s157
                %s173 = sphi %s151, %s151
              $region43: #{_lambda_.3} parent=39 // loop_header_branch
                %170 = sbr.rel (%p168) target = $region47
              $region44: #{_lambda_.3} parent=39 // loop_body
                %v174 = vld [vmem:[%s172] sm:%s165]
                %175 = vst [vmem:[%s173] sm:%s165] %v174
                %v176 = vld [vmem:[%s172 + $0x4] sm:%s165]
                %177 = vst [vmem:[%s173 + $0x4] sm:%s165] %v176
                %v178 = vld [vmem:[%s172 + $0x10] sm:%s165]
                %179 = vst [vmem:[%s173 + $0x8] sm:%s165] %v178
                %v180 = vld [vmem:[%s172 + $0x14] sm:%s165]
                %181 = vst [vmem:[%s173 + $0xc] sm:%s165] %v180
                %v182 = vld [vmem:[%s172 + $0x20] sm:%s165]
                %183 = vst [vmem:[%s173 + $0x10] sm:%s165] %v182
                %v184 = vld [vmem:[%s172 + $0x24] sm:%s165]
                %185 = vst [vmem:[%s173 + $0x14] sm:%s165] %v184
                %v186 = vld [vmem:[%s172 + $0x30] sm:%s165]
                %187 = vst [vmem:[%s173 + $0x18] sm:%s165] %v186
                %v188 = vld [vmem:[%s172 + $0x34] sm:%s165]
                %189 = vst [vmem:[%s173 + $0x1c] sm:%s165] %v188
                %v190 = vld [vmem:[%s172 + $0x40] sm:%s165]
                %191 = vst [vmem:[%s173 + $0x20] sm:%s165] %v190
                %v192 = vld [vmem:[%s172 + $0x44] sm:%s165]
                %193 = vst [vmem:[%s173 + $0x24] sm:%s165] %v192
                %v194 = vld [vmem:[%s172 + $0x50] sm:%s165]
                %195 = vst [vmem:[%s173 + $0x28] sm:%s165] %v194
                %v196 = vld [vmem:[%s172 + $0x54] sm:%s165]
                %197 = vst [vmem:[%s173 + $0x2c] sm:%s165] %v196
                %v198 = vld [vmem:[%s172 + $0x60] sm:%s165]
                %199 = vst [vmem:[%s173 + $0x30] sm:%s165] %v198
                %v200 = vld [vmem:[%s172 + $0x64] sm:%s165]
                %201 = vst [vmem:[%s173 + $0x34] sm:%s165] %v200
                %v202 = vld [vmem:[%s172 + $0x70] sm:%s165]
                %203 = vst [vmem:[%s173 + $0x38] sm:%s165] %v202
                %v204 = vld [vmem:[%s172 + $0x74] sm:%s165]
                %205 = vst [vmem:[%s173 + $0x3c] sm:%s165] %v204
              $region45: #{_lambda_.3} parent=39 // loop_footer
                %s171 = sadd.s32 1, %s167
              $region46: #{_lambda_.3} parent=39 // loop_footer_branch
                %166 = sbr.rel target = $region42
              $region47: #{_lambda_.3} parent=39 // loop_exit
                _
            $region40: #{_lambda_.3} parent=31 // pred_fallthru
              _
          $region32: #{_lambda_.3} parent=27 // pred_fallthru
            _
          %258 = vnop
        $region28: #{_lambda_.3} parent=23 // pred_fallthru
          _
      $region24: #{_lambda_.3} parent=5 // pred_fallthru
        _
      %p259 = scmp.le.s32.totalorder 1, %s12
      %p260 = scmp.lt.s32.totalorder %s12, 9
      %p261 = pnand %p259, %p260
      %p262 = pneg %p261
      // Predicated region
      $region66: #{_lambda_.3} parent=5 // pred_check
        _
      $region67: #{_lambda_.3} parent=5 // pred_check_branch
        %264 = sbr.rel (%p261) target = $region69
      $region68: #{_lambda_.3} parent=5 // pred_region
        %s265 = ssub.s32 %s12, 1
        %s266 = sand.u32 %s39, 1
        %s267 = sand.u32 %s39, 1
        %s268 = smul.addr %s267, 64
        %s269 = scalar_lea.vmem [#allocation3], %s268
        // Predicated region
        $region70: #{_lambda_.3} parent=68 // pred_check
          %p270 = pneg %p52
        $region71: #{_lambda_.3} parent=68 // pred_check_branch
          %272 = sbr.rel (%p270) target = $region73
        $region72: #{_lambda_.3} parent=68 // pred_region
          _
        $region73: #{_lambda_.3} parent=68 // pred_fallthru
          _
        %s273 = sand.u32 %s39, 1
        %s274 = sand.u32 %s39, 1
        %s275 = smul.addr %s274, 64
        %s276 = scalar_lea.vmem [#allocation3], %s275
        %p277 = pneg %p52
        %p278 = pneg %p49
        %p279 = pneg %p73
        %p280 = pneg %p70
        %p281 = pneg %p94
        %p282 = pneg %p91
        %p283 = pneg %p120
        %p284 = pneg %p117
        %s285 = sand.u32 %s107, 1
        %s286 = scalar_lea.sflag [#allocation5], %s285
        %s287 = sand.u32 %s107, 1
        %s288 = smul.addr %s287, 64
        %s289 = scalar_lea.vmem [#allocation4], %s288
        %s290 = smul.u32 8, %s21
        %s291 = smul.u32 16, %s21
        %p293 = scmp.eq.s32.totalorder %s22, 0
        // Predicated region
        $region74: #{_lambda_.3} parent=68 // pred_check
          %p294 = pneg %p293
        $region75: #{_lambda_.3} parent=68 // pred_check_branch
          %296 = sbr.rel (%p294) target = $region77
        $region76: #{_lambda_.3} parent=68 // pred_region
          %vm297 = vcmask 261120
          %298 = vst.msk [vmem:[#allocation2] sm:$0xff] %vm297, 0.0
          %299 = vst.msk [vmem:[#allocation2 + $0x8] sm:$0xff] %vm297, 0.0
          %300 = vst.msk [vmem:[#allocation2 + $0x10] sm:$0xff] %vm297, 0.0
          %301 = vst.msk [vmem:[#allocation2 + $0x18] sm:$0xff] %vm297, 0.0
          %302 = vst.msk [vmem:[#allocation2 + $0x20] sm:$0xff] %vm297, 0.0
          %303 = vst.msk [vmem:[#allocation2 + $0x28] sm:$0xff] %vm297, 0.0
          %304 = vst.msk [vmem:[#allocation2 + $0x30] sm:$0xff] %vm297, 0.0
          %305 = vst.msk [vmem:[#allocation2 + $0x38] sm:$0xff] %vm297, 0.0
          %306 = vst.msk [vmem:[#allocation2 + $0x40] sm:$0xff] %vm297, 0.0
          %307 = vst.msk [vmem:[#allocation2 + $0x48] sm:$0xff] %vm297, 0.0
          %308 = vst.msk [vmem:[#allocation2 + $0x50] sm:$0xff] %vm297, 0.0
          %309 = vst.msk [vmem:[#allocation2 + $0x58] sm:$0xff] %vm297, 0.0
          %310 = vst.msk [vmem:[#allocation2 + $0x60] sm:$0xff] %vm297, 0.0
          %311 = vst.msk [vmem:[#allocation2 + $0x68] sm:$0xff] %vm297, 0.0
          %312 = vst.msk [vmem:[#allocation2 + $0x70] sm:$0xff] %vm297, 0.0
          %313 = vst.msk [vmem:[#allocation2 + $0x78] sm:$0xff] %vm297, 0.0
        $region77: #{_lambda_.3} parent=68 // pred_fallthru
          _
        %s314 = smul.addr %s22, 4
        %s315 = scalar_lea.vmem %s1, %s314
        %v316 = vld [vmem:[%s315] sm:$0xf]
        %v317 = vld [vmem:[%s269] sm:$0xf]
        %v318 = vld [vmem:[%s269 + $0x4] sm:$0xf]
        %v319 = vld [vmem:[%s269 + $0x8] sm:$0xf]
        %v320 = vld [vmem:[%s269 + $0xc] sm:$0xf]
        %v321 = vld [vmem:[%s269 + $0x10] sm:$0xf]
        %v322 = vld [vmem:[%s269 + $0x14] sm:$0xf]
        %v323 = vld [vmem:[%s269 + $0x18] sm:$0xf]
        %v324 = vld [vmem:[%s269 + $0x1c] sm:$0xf]
        %v325 = vld [vmem:[%s269 + $0x20] sm:$0xf]
        %v326 = vld [vmem:[%s269 + $0x24] sm:$0xf]
        %v327 = vld [vmem:[%s269 + $0x28] sm:$0xf]
        %v328 = vld [vmem:[%s269 + $0x2c] sm:$0xf]
        %v329 = vld [vmem:[%s269 + $0x30] sm:$0xf]
        %v330 = vld [vmem:[%s269 + $0x34] sm:$0xf]
        %v331 = vld [vmem:[%s269 + $0x38] sm:$0xf]
        %v332 = vld [vmem:[%s269 + $0x3c] sm:$0xf]
        %v333 = vld [vmem:[#allocation2] sm:$0xff]
        %v334 = vld [vmem:[#allocation2 + $0x8] sm:$0xff]
        %v335 = vld [vmem:[#allocation2 + $0x10] sm:$0xff]
        %v336 = vld [vmem:[#allocation2 + $0x18] sm:$0xff]
        %v337 = vld [vmem:[#allocation2 + $0x20] sm:$0xff]
        %v338 = vld [vmem:[#allocation2 + $0x28] sm:$0xff]
        %v339 = vld [vmem:[#allocation2 + $0x30] sm:$0xff]
        %v340 = vld [vmem:[#allocation2 + $0x38] sm:$0xff]
        %v341 = vld [vmem:[#allocation2 + $0x40] sm:$0xff]
        %v342 = vld [vmem:[#allocation2 + $0x48] sm:$0xff]
        %v343 = vld [vmem:[#allocation2 + $0x50] sm:$0xff]
        %v344 = vld [vmem:[#allocation2 + $0x58] sm:$0xff]
        %v345 = vld [vmem:[#allocation2 + $0x60] sm:$0xff]
        %v346 = vld [vmem:[#allocation2 + $0x68] sm:$0xff]
        %v347 = vld [vmem:[#allocation2 + $0x70] sm:$0xff]
        %v348 = vld [vmem:[#allocation2 + $0x78] sm:$0xff]
        %v365 = vunpack.c.l.b16 %v317
        %v366 = vunpack.c.l.b16 %v318
        %v367 = vunpack.c.l.b16 %v319
        %v368 = vunpack.c.l.b16 %v320
        %v369 = vunpack.c.l.b16 %v321
        %v370 = vunpack.c.l.b16 %v322
        %v371 = vunpack.c.l.b16 %v323
        %v372 = vunpack.c.l.b16 %v324
        %v373 = vunpack.c.l.b16 %v325
        %v374 = vunpack.c.l.b16 %v326
        %v375 = vunpack.c.l.b16 %v327
        %v376 = vunpack.c.l.b16 %v328
        %v377 = vunpack.c.l.b16 %v329
        %v378 = vunpack.c.l.b16 %v330
        %v379 = vunpack.c.l.b16 %v331
        %v380 = vunpack.c.l.b16 %v332
        %v381 = vpack.c.b16 %v366, %v365
        %v382 = vpack.c.b16 %v368, %v367
        %v383 = vpack.c.b16 %v370, %v369
        %v384 = vpack.c.b16 %v372, %v371
        %v385 = vpack.c.b16 %v374, %v373
        %v386 = vpack.c.b16 %v376, %v375
        %v387 = vpack.c.b16 %v378, %v377
        %v388 = vpack.c.b16 %v380, %v379
        %vm389 = vcmask 64512
        %v391 = vsel %vm389, %v381, 0
        %v394 = vsel %vm389, %v382, 0
        %v397 = vsel %vm389, %v383, 0
        %v400 = vsel %vm389, %v384, 0
        %v403 = vsel %vm389, %v385, 0
        %v406 = vsel %vm389, %v386, 0
        %v409 = vsel %vm389, %v387, 0
        %v412 = vsel %vm389, %v388, 0
        %vm414 = vcmask 1043456
        %v416 = vsel %vm414, %v316, 0
        %418 = vmatpush.bf16.msra.mxu0 0
        %419 = vmatpush.bf16.msra.mxu0 0
        %420 = vmatpush.bf16.msra.mxu0 0
        %421 = vmatpush.bf16.msra.mxu0 0
        %422 = vmatpush.bf16.msra.mxu0 0
        %423 = vmatpush.bf16.msra.mxu0 0
        %424 = vmatpush.bf16.msra.mxu0 0
        %425 = vmatpush.bf16.msra.mxu0 %v416
        %426 = vmatmul.bf16.gmra.mxu0 %v391
        %v427 = vpop.f32.mrf.mxu0
        %v428 = vadd.f32 0.0, %v427
        %v429 = vpop.f32.mrf.mxu0
        %v430 = vadd.f32 0.0, %v429
        %431 = vmatmul.bf16.gmra.mxu0 %v394
        %v432 = vpop.f32.mrf.mxu0
        %v433 = vadd.f32 0.0, %v432
        %v434 = vpop.f32.mrf.mxu0
        %v435 = vadd.f32 0.0, %v434
        %436 = vmatmul.bf16.gmra.mxu0 %v397
        %v437 = vpop.f32.mrf.mxu0
        %v438 = vadd.f32 0.0, %v437
        %v439 = vpop.f32.mrf.mxu0
        %v440 = vadd.f32 0.0, %v439
        %441 = vmatmul.bf16.gmra.mxu0 %v400
        %v442 = vpop.f32.mrf.mxu0
        %v443 = vadd.f32 0.0, %v442
        %v444 = vpop.f32.mrf.mxu0
        %v445 = vadd.f32 0.0, %v444
        %446 = vmatmul.bf16.gmra.mxu0 %v403
        %v447 = vpop.f32.mrf.mxu0
        %v448 = vadd.f32 0.0, %v447
        %v449 = vpop.f32.mrf.mxu0
        %v450 = vadd.f32 0.0, %v449
        %451 = vmatmul.bf16.gmra.mxu0 %v406
        %v452 = vpop.f32.mrf.mxu0
        %v453 = vadd.f32 0.0, %v452
        %v454 = vpop.f32.mrf.mxu0
        %v455 = vadd.f32 0.0, %v454
        %456 = vmatmul.bf16.gmra.mxu0 %v409
        %v457 = vpop.f32.mrf.mxu0
        %v458 = vadd.f32 0.0, %v457
        %v459 = vpop.f32.mrf.mxu0
        %v460 = vadd.f32 0.0, %v459
        %461 = vmatmul.bf16.gmra.mxu0 %v412
        %v462 = vpop.f32.mrf.mxu0
        %v463 = vadd.f32 0.0, %v462
        %v464 = vpop.f32.mrf.mxu0
        %v465 = vadd.f32 0.0, %v464
        %466 = vdwg.mxu0
        %v467 = vadd.f32 %v333, %v428
        %v468 = vadd.f32 %v334, %v430
        %v469 = vadd.f32 %v335, %v433
        %v470 = vadd.f32 %v336, %v435
        %v471 = vadd.f32 %v337, %v438
        %v472 = vadd.f32 %v338, %v440
        %v473 = vadd.f32 %v339, %v443
        %v474 = vadd.f32 %v340, %v445
        %v475 = vadd.f32 %v341, %v448
        %v476 = vadd.f32 %v342, %v450
        %v477 = vadd.f32 %v343, %v453
        %v478 = vadd.f32 %v344, %v455
        %v479 = vadd.f32 %v345, %v458
        %v480 = vadd.f32 %v346, %v460
        %v481 = vadd.f32 %v347, %v463
        %v482 = vadd.f32 %v348, %v465
        %vm483 = vcmask 261120
        %484 = vst.msk [vmem:[#allocation2] sm:$0xff] %vm483, %v467
        %485 = vst.msk [vmem:[#allocation2 + $0x8] sm:$0xff] %vm483, %v468
        %486 = vst.msk [vmem:[#allocation2 + $0x10] sm:$0xff] %vm483, %v469
        %487 = vst.msk [vmem:[#allocation2 + $0x18] sm:$0xff] %vm483, %v470
        %488 = vst.msk [vmem:[#allocation2 + $0x20] sm:$0xff] %vm483, %v471
        %489 = vst.msk [vmem:[#allocation2 + $0x28] sm:$0xff] %vm483, %v472
        %490 = vst.msk [vmem:[#allocation2 + $0x30] sm:$0xff] %vm483, %v473
        %491 = vst.msk [vmem:[#allocation2 + $0x38] sm:$0xff] %vm483, %v474
        %492 = vst.msk [vmem:[#allocation2 + $0x40] sm:$0xff] %vm483, %v475
        %493 = vst.msk [vmem:[#allocation2 + $0x48] sm:$0xff] %vm483, %v476
        %494 = vst.msk [vmem:[#allocation2 + $0x50] sm:$0xff] %vm483, %v477
        %495 = vst.msk [vmem:[#allocation2 + $0x58] sm:$0xff] %vm483, %v478
        %496 = vst.msk [vmem:[#allocation2 + $0x60] sm:$0xff] %vm483, %v479
        %497 = vst.msk [vmem:[#allocation2 + $0x68] sm:$0xff] %vm483, %v480
        %498 = vst.msk [vmem:[#allocation2 + $0x70] sm:$0xff] %vm483, %v481
        %499 = vst.msk [vmem:[#allocation2 + $0x78] sm:$0xff] %vm483, %v482
        %p500 = scmp.eq.s32.totalorder %s22, 1
        // Predicated region
        $region78: #{_lambda_.3} parent=68 // pred_check
          %p501 = pneg %p500
        $region79: #{_lambda_.3} parent=68 // pred_check_branch
          %503 = sbr.rel (%p501) target = $region81
        $region80: #{_lambda_.3} parent=68 // pred_region
          %v504 = vld [vmem:[#allocation2] sm:$0xff]
          %v505 = vld [vmem:[#allocation2 + $0x8] sm:$0xff]
          %v506 = vld [vmem:[#allocation2 + $0x10] sm:$0xff]
          %v507 = vld [vmem:[#allocation2 + $0x18] sm:$0xff]
          %v508 = vld [vmem:[#allocation2 + $0x20] sm:$0xff]
          %v509 = vld [vmem:[#allocation2 + $0x28] sm:$0xff]
          %v510 = vld [vmem:[#allocation2 + $0x30] sm:$0xff]
          %v511 = vld [vmem:[#allocation2 + $0x38] sm:$0xff]
          %v512 = vld [vmem:[#allocation2 + $0x40] sm:$0xff]
          %v513 = vld [vmem:[#allocation2 + $0x48] sm:$0xff]
          %v514 = vld [vmem:[#allocation2 + $0x50] sm:$0xff]
          %v515 = vld [vmem:[#allocation2 + $0x58] sm:$0xff]
          %v516 = vld [vmem:[#allocation2 + $0x60] sm:$0xff]
          %v517 = vld [vmem:[#allocation2 + $0x68] sm:$0xff]
          %v518 = vld [vmem:[#allocation2 + $0x70] sm:$0xff]
          %v519 = vld [vmem:[#allocation2 + $0x78] sm:$0xff]
          %v520 = vld [vmem:[%s2] sm:$0x1]
          %v522 = vperm.slane %v520, 0
          %v524 = vadd.f32 %v504, %v522
          %v525 = vadd.f32 %v505, %v522
          %v526 = vadd.f32 %v506, %v522
          %v527 = vadd.f32 %v507, %v522
          %v528 = vadd.f32 %v508, %v522
          %v529 = vadd.f32 %v509, %v522
          %v530 = vadd.f32 %v510, %v522
          %v531 = vadd.f32 %v511, %v522
          %v532 = vadd.f32 %v512, %v522
          %v533 = vadd.f32 %v513, %v522
          %v534 = vadd.f32 %v514, %v522
          %v535 = vadd.f32 %v515, %v522
          %v536 = vadd.f32 %v516, %v522
          %v537 = vadd.f32 %v517, %v522
          %v538 = vadd.f32 %v518, %v522
          %v539 = vadd.f32 %v519, %v522
          %v540 = vmax.f32 %v524, 0.0
          %v541 = vmax.f32 %v525, 0.0
          %v542 = vmax.f32 %v526, 0.0
          %v543 = vmax.f32 %v527, 0.0
          %v544 = vmax.f32 %v528, 0.0
          %v545 = vmax.f32 %v529, 0.0
          %v546 = vmax.f32 %v530, 0.0
          %v547 = vmax.f32 %v531, 0.0
          %v548 = vmax.f32 %v532, 0.0
          %v549 = vmax.f32 %v533, 0.0
          %v550 = vmax.f32 %v534, 0.0
          %v551 = vmax.f32 %v535, 0.0
          %v552 = vmax.f32 %v536, 0.0
          %v553 = vmax.f32 %v537, 0.0
          %v554 = vmax.f32 %v538, 0.0
          %v555 = vmax.f32 %v539, 0.0
          %v556 = vpack.c.bf16 %v540, %v540
          %v557 = vpack.c.bf16 %v541, %v541
          %v558 = vpack.c.bf16 %v542, %v542
          %v559 = vpack.c.bf16 %v543, %v543
          %v560 = vpack.c.bf16 %v544, %v544
          %v561 = vpack.c.bf16 %v545, %v545
          %v562 = vpack.c.bf16 %v546, %v546
          %v563 = vpack.c.bf16 %v547, %v547
          %v564 = vpack.c.bf16 %v548, %v548
          %v565 = vpack.c.bf16 %v549, %v549
          %v566 = vpack.c.bf16 %v550, %v550
          %v567 = vpack.c.bf16 %v551, %v551
          %v568 = vpack.c.bf16 %v552, %v552
          %v569 = vpack.c.bf16 %v553, %v553
          %v570 = vpack.c.bf16 %v554, %v554
          %v571 = vpack.c.bf16 %v555, %v555
          %vm572 = vcmask 257024
          %573 = vst.msk [vmem:[%s289] sm:$0xf] %vm572, %v556
          %574 = vst.msk [vmem:[%s289 + $0x4] sm:$0xf] %vm572, %v557
          %575 = vst.msk [vmem:[%s289 + $0x8] sm:$0xf] %vm572, %v558
          %576 = vst.msk [vmem:[%s289 + $0xc] sm:$0xf] %vm572, %v559
          %577 = vst.msk [vmem:[%s289 + $0x10] sm:$0xf] %vm572, %v560
          %578 = vst.msk [vmem:[%s289 + $0x14] sm:$0xf] %vm572, %v561
          %579 = vst.msk [vmem:[%s289 + $0x18] sm:$0xf] %vm572, %v562
          %580 = vst.msk [vmem:[%s289 + $0x1c] sm:$0xf] %vm572, %v563
          %581 = vst.msk [vmem:[%s289 + $0x20] sm:$0xf] %vm572, %v564
          %582 = vst.msk [vmem:[%s289 + $0x24] sm:$0xf] %vm572, %v565
          %583 = vst.msk [vmem:[%s289 + $0x28] sm:$0xf] %vm572, %v566
          %584 = vst.msk [vmem:[%s289 + $0x2c] sm:$0xf] %vm572, %v567
          %585 = vst.msk [vmem:[%s289 + $0x30] sm:$0xf] %vm572, %v568
          %586 = vst.msk [vmem:[%s289 + $0x34] sm:$0xf] %vm572, %v569
          %587 = vst.msk [vmem:[%s289 + $0x38] sm:$0xf] %vm572, %v570
          %588 = vst.msk [vmem:[%s289 + $0x3c] sm:$0xf] %vm572, %v571
        $region81: #{_lambda_.3} parent=68 // pred_fallthru
          _
        %s589 = sand.u32 %s107, 1
        %s590 = scalar_lea.sflag [#allocation5], %s589
        %s591 = sand.u32 %s107, 1
        %s592 = smul.addr %s591, 64
        %s593 = scalar_lea.vmem [#allocation4], %s592
        // Predicated region
        $region82: #{_lambda_.3} parent=68 // pred_check
          %p594 = pneg %p117
        $region83: #{_lambda_.3} parent=68 // pred_check_branch
          %596 = sbr.rel (%p594) target = $region85
        $region84: #{_lambda_.3} parent=68 // pred_region
          %s597 = smul.u32 16, %s21
          %599 = vsyncadd %s590, 0
          %s600 = smul.addr %s597, 4
          %s601 = scalar_lea.hbm %s3, %s600
          %s602 = sshll.u32 %s593, 4
          %s603 = int_to_ptr.vmem [resolvable:$true] %s602
          %s604 = sshll.u32 %s601, 4
          %s605 = int_to_ptr.hbm [resolvable:$true] %s604
          %610 = dma.vmem_to_hbm [thread:$0]  %s603, 1024, %s605, %s590, 64, 64, 4
        $region85: #{_lambda_.3} parent=68 // pred_fallthru
          _
      $region69: #{_lambda_.3} parent=5 // pred_fallthru
        _
      %p611 = scmp.le.s32.totalorder 2, %s12
      // Predicated region
      $region86: #{_lambda_.3} parent=5 // pred_check
        %p612 = pneg %p611
      $region87: #{_lambda_.3} parent=5 // pred_check_branch
        %614 = sbr.rel (%p612) target = $region89
      $region88: #{_lambda_.3} parent=5 // pred_region
        %s615 = ssub.s32 %s12, 2
        // Predicated region
        $region90: #{_lambda_.3} parent=88 // pred_check
          %p616 = pneg %p123
        $region91: #{_lambda_.3} parent=88 // pred_check_branch
          %618 = sbr.rel (%p616) target = $region93
        $region92: #{_lambda_.3} parent=88 // pred_region
          %s619 = sand.u32 %s108, 1
          %s620 = scalar_lea.sflag [#allocation5], %s619
          %s621 = sand.u32 %s108, 1
          %s622 = smul.addr %s621, 64
          %s623 = scalar_lea.vmem [#allocation4], %s622
          %625 = dma.done %s620, 1024
        $region93: #{_lambda_.3} parent=88 // pred_fallthru
          _
      $region89: #{_lambda_.3} parent=5 // pred_fallthru
        _
    $region6: #{_lambda_.3} parent=1 // loop_footer
      %s16 = sadd.s32 1, %s12
    $region7: #{_lambda_.3} parent=1 // loop_footer_branch
      %11 = sbr.rel target = $region3
    $region8: #{_lambda_.3} parent=1 // loop_exit
      _
    %626 = vsyncpa [#allocation5], 1
    %s627 = scalar_lea.sflag [#allocation5], 1
    %628 = vsyncpa %s627, 1

</llo_original>
